<compile_context>
chip_gen: v5e
topology: v5e:2x2
jax: 0.10.0
libtpu: 0.0.40
codegen_flags: <defaults>
</compile_context>

<pallas_src>
import functools
import math

import jax
import jax.numpy as jnp
from jax import lax
from jax.experimental import pallas as pl
from jax.experimental.pallas import tpu as pltpu

# Finite "minus infinity": avoids inf-inf NaNs in the online softmax.
_NEG_INF = -1e30


def _pick_tile(dim, cap, aligns=(8,)):
    """Largest divisor of `dim` <= cap that is a multiple of one of `aligns`.

    Alignments are tried in order (prefer larger, MXU-friendly ones first).
    Returning `dim` (the full extent) is always a legal TPU block size.
    """
    if dim <= cap:
        return dim
    for align in aligns:
        d = (cap // align) * align
        while d >= align:
            if dim % d == 0:
                return d
            d -= align
    # TODO(synk): pad + mask for pathological (prime-ish) dims instead of a
    # full-extent block, which can blow VMEM on v7x (64 MiB) and kill pipelining.
    return dim


def _vmem_capacity_bytes():
    try:
        return int(pltpu.get_tpu_info().vmem_capacity_bytes)
    except Exception:
        return 64 * 2 ** 20   # conservative: smallest per-TC VMEM (v7x)


# ----------------------------- tiled linear projection kernels -----------------------------
def _matmul_kernel(x_ref, w_ref, o_ref, acc_ref):
    @pl.when(pl.program_id(2) == 0)
    def _():
        acc_ref[...] = jnp.zeros(acc_ref.shape, acc_ref.dtype)

    acc_ref[...] += jnp.dot(x_ref[...], w_ref[...],
                            preferred_element_type=jnp.float32)

    @pl.when(pl.program_id(2) == pl.num_programs(2) - 1)
    def _():
        o_ref[...] = acc_ref[...].astype(o_ref.dtype)


def _matmul_bias_kernel(x_ref, w_ref, b_ref, o_ref, acc_ref):
    @pl.when(pl.program_id(2) == 0)
    def _():
        acc_ref[...] = jnp.zeros(acc_ref.shape, acc_ref.dtype)

    acc_ref[...] += jnp.dot(x_ref[...], w_ref[...],
                            preferred_element_type=jnp.float32)

    @pl.when(pl.program_id(2) == pl.num_programs(2) - 1)
    def _():
        o_ref[...] = (acc_ref[...] + b_ref[...].astype(jnp.float32)).astype(o_ref.dtype)


def pallas_linear(x2d, w, b=None, *, tm_cap=512, tn_cap=512, tk_cap=512):
    """x2d: (M, K), w: (K, N) (already transposed vs torch's (N, K)), b: (1, N) or None."""
    M, K = x2d.shape
    N = w.shape[1]
    tm = _pick_tile(M, tm_cap, (8,))
    tn = _pick_tile(N, tn_cap, (128,))
    tk = _pick_tile(K, tk_cap, (128,))
    grid = (M // tm, N // tn, K // tk)
    out_shape = jax.ShapeDtypeStruct((M, N), x2d.dtype)
    scratch = [pltpu.VMEM((tm, tn), jnp.float32)]
    cparams = pltpu.CompilerParams(
        dimension_semantics=("parallel", "parallel", "arbitrary"))
    if b is None:
        return pl.pallas_call(
            _matmul_kernel,
            out_shape=out_shape,
            grid=grid,
            in_specs=[pl.BlockSpec((tm, tk), lambda i, j, k: (i, k)),
                      pl.BlockSpec((tk, tn), lambda i, j, k: (k, j))],
            out_specs=pl.BlockSpec((tm, tn), lambda i, j, k: (i, j)),
            scratch_shapes=scratch,
            compiler_params=cparams,
        )(x2d, w)
    return pl.pallas_call(
        _matmul_bias_kernel,
        out_shape=out_shape,
        grid=grid,
        in_specs=[pl.BlockSpec((tm, tk), lambda i, j, k: (i, k)),
                  pl.BlockSpec((tk, tn), lambda i, j, k: (k, j)),
                  pl.BlockSpec((1, tn), lambda i, j, k: (0, j))],
        out_specs=pl.BlockSpec((tm, tn), lambda i, j, k: (i, j)),
        scratch_shapes=scratch,
        compiler_params=cparams,
    )(x2d, w, b)


# ------------------------------- flash GQA attention kernel -------------------------------
def _gqa_flash_kernel(q_ref, k_ref, v_ref, o_ref, q_scr, m_ref, l_ref, acc_ref, *,
                      causal, group, head_dim, tq, tkv):
    qi = pl.program_id(1)
    kv_i = pl.program_id(3)
    gt = group * tq

    @pl.when(kv_i == 0)
    def _init():
        # Relayout Q (tq, group*D) -> (group*tq, D) ONCE per (b, qi, h) so every KV
        # step issues a single large QK^T and a single large PV matmul for the
        # whole GQA group (scale already folded into the Q projection weight).
        for g in range(group):
            q_scr[g * tq:(g + 1) * tq, :] = q_ref[0, :, g * head_dim:(g + 1) * head_dim]
        m_ref[...] = jnp.full(m_ref.shape, _NEG_INF, m_ref.dtype)
        l_ref[...] = jnp.zeros(l_ref.shape, l_ref.dtype)
        acc_ref[...] = jnp.zeros(acc_ref.shape, acc_ref.dtype)

    def _make_step(apply_mask):
        def _step():
            k = k_ref[0]                      # (tkv, D) bf16 -> straight to the MXU
            v = v_ref[0]                      # (tkv, D) bf16
            s = lax.dot_general(q_scr[...], k, (((1,), (1,)), ((), ())),
                                preferred_element_type=jnp.float32)   # (gt, tkv) f32
            if apply_mask:
                # Built only on tiles straddling the diagonal (top-left aligned,
                # as torch SDPA's is_causal).
                row = lax.broadcasted_iota(jnp.int32, (tq, tkv), 0)
                if group > 1:
                    row = jnp.concatenate([row] * group, axis=0)      # (gt, tkv)
                col = kv_i * tkv + lax.broadcasted_iota(jnp.int32, (gt, tkv), 1)
                s = jnp.where(col <= qi * tq + row, s, _NEG_INF)
            m_prev = m_ref[...]
            m_new = jnp.maximum(m_prev, jnp.max(s, axis=-1, keepdims=True))
            alpha = jnp.exp(m_prev - m_new)
            p = jnp.exp(s - m_new)
            l_ref[...] = alpha * l_ref[...] + jnp.sum(p, axis=-1, keepdims=True)
            acc_ref[...] = alpha * acc_ref[...] + jnp.dot(
                p.astype(v.dtype), v, preferred_element_type=jnp.float32)
            m_ref[...] = m_new
        return _step

    if causal:
        q_start = qi * tq
        kv_start = kv_i * tkv
        live = kv_start <= q_start + (tq - 1)      # tile has >=1 unmasked entry
        diag = kv_start + (tkv - 1) > q_start      # tile straddles the diagonal
        pl.when(jnp.logical_and(live, diag))(_make_step(True))
        pl.when(jnp.logical_and(live, jnp.logical_not(diag)))(_make_step(False))
    else:
        _make_step(False)()

    @pl.when(kv_i == pl.num_programs(3) - 1)
    def _finalize():
        inv = pl.reciprocal(l_ref[...], approx=True)   # EUP slot, off the VALU path
        out = acc_ref[...] * inv                        # (gt, D) f32
        for g in range(group):
            o_ref[0, :, g * head_dim:(g + 1) * head_dim] = (
                out[g * tq:(g + 1) * tq, :]).astype(o_ref.dtype)


def pallas_gqa_attention(q, kv, *, n_q_heads, n_kv_heads, head_dim, causal=False,
                         k_head_base=0, v_head_base=None, q_tile=512, kv_tile=512):
    """q: (B, Sq, >=Hq*D) (Q heads occupy the first Hq*D columns);
    kv: (B, Skv, C) with K head h at columns [(k_head_base+h)*D, ...) and
    V head h at [(v_head_base+h)*D, ...).  Returns (B, Sq, Hq*D), lane-dense,
    ready for the output projection with no transposes on either side.
    """
    B, Sq, _ = q.shape
    Skv = kv.shape[1]
    D = head_dim
    assert n_q_heads % n_kv_heads == 0
    group = n_q_heads // n_kv_heads
    if v_head_base is None:
        v_head_base = n_kv_heads
    # TODO(synk): head dims that are not a multiple of 128 need a padded or 4-D
    # layout for the per-head BlockSpec slicing; not implemented here.
    assert D % 128 == 0, "head_dim must be a multiple of 128 for this kernel"

    tq = _pick_tile(Sq, q_tile, (8,))
    tkv = _pick_tile(Skv, kv_tile, (256, 128, 8))   # prefer 256-multiples (v6e/v7x MXU)
    grid = (B, Sq // tq, n_kv_heads, Skv // tkv)
    gt = group * tq

    kernel = functools.partial(_gqa_flash_kernel, causal=causal, group=group,
                               head_dim=D, tq=tq, tkv=tkv)

    if causal:
        # Clamp K/V block indices past the diagonal so fully-masked KV tiles re-use
        # the previous block index -> Pallas elides their HBM DMAs.
        def k_map(b, qi, h, ki):
            ki_eff = jnp.minimum(ki, ((qi + 1) * tq - 1) // tkv)
            return (b, ki_eff, k_head_base + h)

        def v_map(b, qi, h, ki):
            ki_eff = jnp.minimum(ki, ((qi + 1) * tq - 1) // tkv)
            return (b, ki_eff, v_head_base + h)
    else:
        def k_map(b, qi, h, ki):
            return (b, ki, k_head_base + h)

        def v_map(b, qi, h, ki):
            return (b, ki, v_head_base + h)

    # VMEM budget: double-buffered q/o/k/v blocks + persistent scratch + headroom
    # for Mosaic internal scratch, capped at 75% of the physical per-core VMEM.
    dsz = jnp.dtype(q.dtype).itemsize
    block_bytes = 2 * tq * group * D * dsz + 2 * tkv * D * dsz
    scratch_bytes = gt * D * dsz + gt * (D + 2) * 4
    needed = 2 * block_bytes + scratch_bytes + (8 << 20)
    vmem_limit = int(max(32 << 20, min(needed, (_vmem_capacity_bytes() * 3) // 4)))

    # TODO(synk): on v5e, if profiles show DMA waits on K/V, add
    # pipeline_mode=pl.Buffered(3) to the two K/V BlockSpecs below.
    return pl.pallas_call(
        kernel,
        out_shape=jax.ShapeDtypeStruct((B, Sq, n_q_heads * D), q.dtype),
        grid=grid,
        in_specs=[
            # Q: all heads of the current GQA group (block index h in group*D units).
            pl.BlockSpec((1, tq, group * D), lambda b, qi, h, ki: (b, qi, h)),
            # K / V: per-head D-wide slices of the fused tensor (zero-copy split).
            pl.BlockSpec((1, tkv, D), k_map),
            pl.BlockSpec((1, tkv, D), v_map),
        ],
        out_specs=pl.BlockSpec((1, tq, group * D), lambda b, qi, h, ki: (b, qi, h)),
        scratch_shapes=[
            pltpu.VMEM((gt, D), q.dtype),        # group-batched Q relayout (bf16)
            pltpu.VMEM((gt, 1), jnp.float32),    # running max
            pltpu.VMEM((gt, 1), jnp.float32),    # running denominator
            pltpu.VMEM((gt, D), jnp.float32),    # running numerator
        ],
        compiler_params=pltpu.CompilerParams(
            dimension_semantics=("parallel", "parallel", "parallel", "arbitrary"),
            vmem_limit_bytes=vmem_limit,
        ),
    )(q, kv, kv)   # fused tensor passed twice (different index maps for K and V)


# ------------------------------------- module wrapper -------------------------------------
class BuiltinGQAAttentionPallas:
    """Inference-mode Pallas port of BuiltinGQAAttention (dropout disabled)."""

    def __init__(self, q_dim, context_dim=None, n_q_heads=8, n_kv_heads=None,
                 head_dim=64, dropout=0.1, is_causal=False,
                 dtype=jnp.bfloat16, q_tile=512, kv_tile=512,
                 key=jax.random.PRNGKey(0)):
        self.n_q_heads = n_q_heads
        self.n_kv_heads = n_kv_heads if n_kv_heads is not None else n_q_heads
        self.head_dim = head_dim
        self.is_causal = is_causal
        self.q_dim = q_dim
        self.context_dim = context_dim if context_dim is not None else q_dim
        self.dropout_p = dropout      # inference path only: dropout is disabled
        self.dtype = dtype
        self.q_tile = q_tile
        self.kv_tile = kv_tile

        kq, kk, kv, ko, kb = jax.random.split(key, 5)
        wscale = 0.05
        hq, hkv, d = n_q_heads, self.n_kv_heads, head_dim
        softmax_scale = 1.0 / math.sqrt(d)
        # Weights stored (in_features, out_features) in bf16.  The softmax scale is
        # folded into the (constant) Q projection weight so the attention kernel
        # never multiplies by it.  K/V fused on the output dim; for self-attention
        # the fully fused [wq | wk | wv] weight enables a single projection pass.
        wq = jax.random.normal(kq, (q_dim, hq * d), jnp.float32) * wscale
        self.wq = (wq * softmax_scale).astype(dtype)
        wk = jax.random.normal(kk, (self.context_dim, hkv * d), jnp.float32) * wscale
        wv = jax.random.normal(kv, (self.context_dim, hkv * d), jnp.float32) * wscale
        self.wkv = jnp.concatenate([wk, wv], axis=1).astype(dtype)
        if self.context_dim == q_dim:
            self.wqkv = jnp.concatenate([self.wq, self.wkv], axis=1)
        else:
            self.wqkv = None
        self.wo = (jax.random.normal(ko, (hq * d, q_dim), jnp.float32) * wscale).astype(dtype)
        self.bo = (jax.random.normal(kb, (1, q_dim), jnp.float32) * wscale).astype(dtype)

    def __call__(self, x, context=None, mask=None, is_causal=None):
        if mask is not None:
            # TODO(synk): arbitrary boolean attention masks are not implemented
            # (only the mask=None / is_causal paths of the PyTorch module).
            raise NotImplementedError("boolean `mask` is not supported by this kernel")
        self_attn = context is None
        if context is None:
            context = x
        causal = self.is_causal if is_causal is None else is_causal

        bsz, seq_q, _ = x.shape
        seq_kv = context.shape[1]
        hq, hkv, d = self.n_q_heads, self.n_kv_heads, self.head_dim

        x = x.astype(self.dtype)
        context = context.astype(self.dtype)

        if self_attn and self.wqkv is not None:
            # Single fused Q/K/V projection over x; attention reads Q, K, V straight
            # out of the fused (B, S, (Hq+2*Hkv)*D) tensor via BlockSpec offsets.
            qkv = pallas_linear(x.reshape(bsz * seq_q, self.q_dim), self.wqkv)
            qkv = qkv.reshape(bsz, seq_q, (hq + 2 * hkv) * d)
            attn = pallas_gqa_attention(
                qkv, qkv, n_q_heads=hq, n_kv_heads=hkv, head_dim=d, causal=causal,
                k_head_base=hq, v_head_base=hq + hkv,
                q_tile=self.q_tile, kv_tile=self.kv_tile)            # (B, Sq, Hq*D)
        else:
            q = pallas_linear(x.reshape(bsz * seq_q, self.q_dim), self.wq)
            kvp = pallas_linear(context.reshape(bsz * seq_kv, self.context_dim), self.wkv)
            q = q.reshape(bsz, seq_q, hq * d)
            kvp = kvp.reshape(bsz, seq_kv, 2 * hkv * d)
            attn = pallas_gqa_attention(
                q, kvp, n_q_heads=hq, n_kv_heads=hkv, head_dim=d, causal=causal,
                k_head_base=0, v_head_base=hkv,
                q_tile=self.q_tile, kv_tile=self.kv_tile)            # (B, Sq, Hq*D)

        out = pallas_linear(attn.reshape(bsz * seq_q, hq * d), self.wo, self.bo)
        return out.reshape(bsz, seq_q, self.q_dim)


# ------------------------------------ reference (JAX) ------------------------------------
def _reference(mod, x, context=None, causal=False):
    """Pure-JAX reference mirroring the kernel numerics (bf16 matmul inputs, f32 acc).

    Note: the softmax scale is folded into mod.wq, so no explicit scale here.
    """
    if context is None:
        context = x
    dt = mod.dtype
    x = x.astype(dt)
    context = context.astype(dt)
    B, Sq, _ = x.shape
    Skv = context.shape[1]
    Hq, Hkv, D = mod.n_q_heads, mod.n_kv_heads, mod.head_dim

    q = jnp.dot(x.reshape(-1, mod.q_dim), mod.wq,
                preferred_element_type=jnp.float32).astype(dt)
    kv = jnp.dot(context.reshape(-1, mod.context_dim), mod.wkv,
                 preferred_element_type=jnp.float32).astype(dt)
    q = q.reshape(B, Sq, Hq, D).transpose(0, 2, 1, 3)
    k = kv[:, :Hkv * D].reshape(B, Skv, Hkv, D).transpose(0, 2, 1, 3)
    v = kv[:, Hkv * D:].reshape(B, Skv, Hkv, D).transpose(0, 2, 1, 3)

    group = Hq // Hkv
    k = jnp.repeat(k, group, axis=1)
    v = jnp.repeat(v, group, axis=1)

    s = jnp.einsum("bhqd,bhkd->bhqk", q, k, preferred_element_type=jnp.float32)
    if causal:
        row = jnp.arange(Sq)[:, None]
        col = jnp.arange(Skv)[None, :]
        s = jnp.where(col <= row, s, -jnp.inf)
    m = jnp.max(s, axis=-1, keepdims=True)
    p = jnp.exp(s - m)
    l = jnp.sum(p, axis=-1, keepdims=True)
    o = jnp.einsum("bhqk,bhkd->bhqd", p.astype(dt), v,
                   preferred_element_type=jnp.float32)
    o = (o / l).astype(dt)
    o = o.transpose(0, 2, 1, 3).reshape(B, Sq, Hq * D)
    out = jnp.dot(o, mod.wo, preferred_element_type=jnp.float32) + mod.bo.astype(jnp.float32)
    return out.astype(dt)


if __name__ == "__main__":
    root = jax.random.PRNGKey(0)
    k_x, k_ctx, k_p1, k_x2, k_p2 = jax.random.split(root, 5)

    # --- Case 1: cross-attention GQA (Hq=4, Hkv=2), non-causal, 2 KV tiles ---
    bsz, seq_q, seq_kv = 2, 128, 256
    q_dim, context_dim = 64, 96
    n_q_heads, n_kv_heads, head_dim = 4, 2, 128

    x = jax.random.normal(k_x, (bsz, seq_q, q_dim), jnp.float32)
    ctx = jax.random.normal(k_ctx, (bsz, seq_kv, context_dim), jnp.float32)

    mod = BuiltinGQAAttentionPallas(
        q_dim=q_dim, context_dim=context_dim, n_q_heads=n_q_heads,
        n_kv_heads=n_kv_heads, head_dim=head_dim, dropout=0.1, is_causal=False,
        q_tile=128, kv_tile=128, key=k_p1)

    out = jax.block_until_ready(mod(x, ctx))
    ref = _reference(mod, x, ctx, causal=False)
    assert out.shape == (bsz, seq_q, q_dim)
    assert jnp.allclose(out.astype(jnp.float32), ref.astype(jnp.float32),
                        atol=1e-2, rtol=1e-2), "cross-attention mismatch vs reference"

    # --- Case 2: causal self-attention (fused QKV projection, Q-tiling, KV-tile
    #     skipping + DMA-elision via clamped index maps, diag/non-diag branches) ---
    seq = 256
    x2 = jax.random.normal(k_x2, (bsz, seq, q_dim), jnp.float32)
    mod2 = BuiltinGQAAttentionPallas(
        q_dim=q_dim, n_q_heads=n_q_heads, n_kv_heads=n_kv_heads,
        head_dim=head_dim, dropout=0.1, is_causal=True,
        q_tile=128, kv_tile=128, key=k_p2)
    out2 = jax.block_until_ready(mod2(x2))
    ref2 = _reference(mod2, x2, None, causal=True)
    assert out2.shape == (bsz, seq, q_dim)
    assert jnp.allclose(out2.astype(jnp.float32), ref2.astype(jnp.float32),
                        atol=1e-2, rtol=1e-2), "causal self-attention mismatch vs reference"

    print("KERNEL_OK")
</pallas_src>

<mosaic_0001>
module attributes {stable_mosaic.version = 11 : i64} {
  func.func @_matmul_kernel(%arg0: i32, %arg1: i32, %arg2: i32, %arg3: memref<256x64xbf16, #tpu.memory_space<vmem>>, %arg4: memref<64x512xbf16, #tpu.memory_space<vmem>>, %arg5: memref<256x512xbf16, #tpu.memory_space<vmem>>, %arg6: memref<256x512xf32, #tpu.memory_space<vmem>>) attributes {dimension_semantics = [#tpu.dimension_semantics<parallel>, #tpu.dimension_semantics<parallel>, #tpu.dimension_semantics<arbitrary>], iteration_bounds = array<i64: 1, 1, 1>, scalar_prefetch = 0 : i64, scratch_operands = 1 : i64, tpu.core_type = #tpu.core_type<tc>, window_params = [{transform_indices = @transform_0, window_bounds = array<i64: 256, 64>}, {transform_indices = @transform_1, window_bounds = array<i64: 64, 512>}, {transform_indices = @transform_2, window_bounds = array<i64: 256, 512>}]} {
    %c0_i32 = arith.constant 0 : i32
    %0 = arith.cmpi eq, %arg2, %c0_i32 : i32
    %1 = arith.extui %0 : i1 to i32
    %c0_i32_0 = arith.constant 0 : i32
    %2 = arith.cmpi ne, %1, %c0_i32_0 : i32
    scf.if %2 {
      %cst_10 = arith.constant 0.000000e+00 : f32
      %12 = vector.broadcast %cst_10 : f32 to vector<256x512xf32>
      %c0_11 = arith.constant 0 : index
      %c0_12 = arith.constant 0 : index
      %13 = vector.load %arg6[%c0_11, %c0_12] : memref<256x512xf32, #tpu.memory_space<vmem>>, vector<256x512xf32>
      tpu.vector_store %arg6[%c0_11, %c0_12], %12 {strides = array<i32>} : memref<256x512xf32, #tpu.memory_space<vmem>>, vector<256x512xf32>,
    } else {
    }
    %c0 = arith.constant 0 : index
    %c0_1 = arith.constant 0 : index
    %3 = vector.load %arg6[%c0, %c0_1] : memref<256x512xf32, #tpu.memory_space<vmem>>, vector<256x512xf32>
    %c0_2 = arith.constant 0 : index
    %c0_3 = arith.constant 0 : index
    %4 = vector.load %arg3[%c0_2, %c0_3] : memref<256x64xbf16, #tpu.memory_space<vmem>>, vector<256x64xbf16>
    %c0_4 = arith.constant 0 : index
    %c0_5 = arith.constant 0 : index
    %5 = vector.load %arg4[%c0_4, %c0_5] : memref<64x512xbf16, #tpu.memory_space<vmem>>, vector<64x512xbf16>
    %cst = arith.constant dense<0.000000e+00> : vector<256x512xf32>
    %6 = tpu.matmul %4, %5, %cst {dimension_numbers = #tpu.dot_dimension_numbers<[1], [0], [0], [1], [0, 0, 1, 1], [], []>} : vector<256x64xbf16>, vector<64x512xbf16>, vector<256x512xf32> -> vector<256x512xf32>
    %7 = arith.addf %3, %6 : vector<256x512xf32>
    %c0_6 = arith.constant 0 : index
    %c0_7 = arith.constant 0 : index
    %8 = vector.load %arg6[%c0_6, %c0_7] : memref<256x512xf32, #tpu.memory_space<vmem>>, vector<256x512xf32>
    tpu.vector_store %arg6[%c0_6, %c0_7], %7 {strides = array<i32>} : memref<256x512xf32, #tpu.memory_space<vmem>>, vector<256x512xf32>,
    %c0_i32_8 = arith.constant 0 : i32
    %9 = arith.cmpi eq, %arg2, %c0_i32_8 : i32
    %10 = arith.extui %9 : i1 to i32
    %c0_i32_9 = arith.constant 0 : i32
    %11 = arith.cmpi ne, %10, %c0_i32_9 : i32
    scf.if %11 {
      %c0_10 = arith.constant 0 : index
      %c0_11 = arith.constant 0 : index
      %12 = vector.load %arg6[%c0_10, %c0_11] : memref<256x512xf32, #tpu.memory_space<vmem>>, vector<256x512xf32>
      %13 = arith.truncf %12 : vector<256x512xf32> to vector<256x512xbf16>
      %c0_12 = arith.constant 0 : index
      %c0_13 = arith.constant 0 : index
      %14 = vector.load %arg5[%c0_12, %c0_13] : memref<256x512xbf16, #tpu.memory_space<vmem>>, vector<256x512xbf16>
      tpu.vector_store %arg5[%c0_12, %c0_13], %13 {strides = array<i32>} : memref<256x512xbf16, #tpu.memory_space<vmem>>, vector<256x512xbf16>,
    } else {
    }
    return
  }
  func.func @transform_0(%arg0: i32, %arg1: i32, %arg2: i32) -> (i32, i32) {
    %c0_i32 = arith.constant 0 : i32
    return %arg0, %arg2 : i32, i32
  }
  func.func @transform_1(%arg0: i32, %arg1: i32, %arg2: i32) -> (i32, i32) {
    %c0_i32 = arith.constant 0 : i32
    return %arg2, %arg1 : i32, i32
  }
  func.func @transform_2(%arg0: i32, %arg1: i32, %arg2: i32) -> (i32, i32) {
    %c0_i32 = arith.constant 0 : i32
    return %arg0, %arg1 : i32, i32
  }
}

</mosaic_0001>

<llo_original>
// kernel: tpu_custom_call.1
$region0: #{tpu_custom_call.1}
  #allocation0 [shape = 'u32[]', space=smem, size = 0x4, offset = 0x4, fixed_abs, tag = 'smem constant byte address 0x4 - core index']
  #allocation1 [shape = 'u32[72,128]{1,0:T(1,128)}', space=vmem, size = 0x9000, scoped, tag = 'internal scratch']
  #allocation2 [shape = 'f32[256,512]{1,0:T(8,128)}', space=vmem, size = 0x80000, scoped, tag = 'scratch operand']
  %s0 = inlined_call_operand.vmem [shape: bf16[256,64], index: 0, kind: input, shape index: {}]
  %s1 = inlined_call_operand.vmem [shape: bf16[64,512], index: 1, kind: input, shape index: {}]
  %s2 = inlined_call_operand.hbm [shape: bf16[256,512], index: 2, kind: output, shape index: {}]
  %s3 = sld [smem:[#allocation0]]
  $region26: #{tpu_custom_call.1} parent=0
    _
  %s5 = ssub.s32 1, %s3
  %s6 = scalar_select 0, %s5, %s3
  $region1: #{tpu_custom_call.1} parent=0
    #allocation3 [shape = 'u8[262144]{0}', space=vmem, size = 0x40000, scoped, tag = 'output window, operand 0, single buffered']
    #allocation4 [shape = 's32[1]{0}', space=sflag, size = 0x4, scoped, tag = 'scoped memory for tpu_custom_call.1']
    %7 = vsyncpa [#allocation4], 0
    // Predicated region
    $region2: #{tpu_custom_call.1} parent=1 // pred_check
      _
    $region3: #{tpu_custom_call.1} parent=1 // pred_check_branch
      %9 = sbr.rel (0) target = $region5
    $region4: #{tpu_custom_call.1} parent=1 // pred_region
      _
    $region5: #{tpu_custom_call.1} parent=1 // pred_fallthru
      _
    // Predicated region
    $region6: #{tpu_custom_call.1} parent=1 // pred_check
      _
    $region7: #{tpu_custom_call.1} parent=1 // pred_check_branch
      %11 = sbr.rel (0) target = $region9
    $region8: #{tpu_custom_call.1} parent=1 // pred_region
      _
    $region9: #{tpu_custom_call.1} parent=1 // pred_fallthru
      _
    %p13 = scmp.eq.s32.totalorder 0, 0
    // Predicated region
    $region10: #{tpu_custom_call.1} parent=1 // pred_check
      %p14 = pneg %p13
    $region11: #{tpu_custom_call.1} parent=1 // pred_check_branch
      %16 = sbr.rel (%p14) target = $region13
    $region12: #{tpu_custom_call.1} parent=1 // pred_region
      %17 = vst [vmem:[#allocation2] sm:$0xff] 0.0
      %18 = vst [vmem:[#allocation2 + $0x8] sm:$0xff] 0.0
      %19 = vst [vmem:[#allocation2 + $0x10] sm:$0xff] 0.0
      %20 = vst [vmem:[#allocation2 + $0x18] sm:$0xff] 0.0
      %21 = vst [vmem:[#allocation2 + $0x20] sm:$0xff] 0.0
      %22 = vst [vmem:[#allocation2 + $0x28] sm:$0xff] 0.0
      %23 = vst [vmem:[#allocation2 + $0x30] sm:$0xff] 0.0
      %24 = vst [vmem:[#allocation2 + $0x38] sm:$0xff] 0.0
      %25 = vst [vmem:[#allocation2 + $0x40] sm:$0xff] 0.0
      %26 = vst [vmem:[#allocation2 + $0x48] sm:$0xff] 0.0
      %27 = vst [vmem:[#allocation2 + $0x50] sm:$0xff] 0.0
      %28 = vst [vmem:[#allocation2 + $0x58] sm:$0xff] 0.0
      %29 = vst [vmem:[#allocation2 + $0x60] sm:$0xff] 0.0
      %30 = vst [vmem:[#allocation2 + $0x68] sm:$0xff] 0.0
      %31 = vst [vmem:[#allocation2 + $0x70] sm:$0xff] 0.0
      %32 = vst [vmem:[#allocation2 + $0x78] sm:$0xff] 0.0
      %33 = vst [vmem:[#allocation2 + $0x80] sm:$0xff] 0.0
      %34 = vst [vmem:[#allocation2 + $0x88] sm:$0xff] 0.0
      %35 = vst [vmem:[#allocation2 + $0x90] sm:$0xff] 0.0
      %36 = vst [vmem:[#allocation2 + $0x98] sm:$0xff] 0.0
      %37 = vst [vmem:[#allocation2 + $0xa0] sm:$0xff] 0.0
      %38 = vst [vmem:[#allocation2 + $0xa8] sm:$0xff] 0.0
      %39 = vst [vmem:[#allocation2 + $0xb0] sm:$0xff] 0.0
      %40 = vst [vmem:[#allocation2 + $0xb8] sm:$0xff] 0.0
      %41 = vst [vmem:[#allocation2 + $0xc0] sm:$0xff] 0.0
      %42 = vst [vmem:[#allocation2 + $0xc8] sm:$0xff] 0.0
      %43 = vst [vmem:[#allocation2 + $0xd0] sm:$0xff] 0.0
      %44 = vst [vmem:[#allocation2 + $0xd8] sm:$0xff] 0.0
      %45 = vst [vmem:[#allocation2 + $0xe0] sm:$0xff] 0.0
      %46 = vst [vmem:[#allocation2 + $0xe8] sm:$0xff] 0.0
      %47 = vst [vmem:[#allocation2 + $0xf0] sm:$0xff] 0.0
      %48 = vst [vmem:[#allocation2 + $0xf8] sm:$0xff] 0.0
      %49 = vst [vmem:[#allocation2 + $0x100] sm:$0xff] 0.0
      %50 = vst [vmem:[#allocation2 + $0x108] sm:$0xff] 0.0
      %51 = vst [vmem:[#allocation2 + $0x110] sm:$0xff] 0.0
      %52 = vst [vmem:[#allocation2 + $0x118] sm:$0xff] 0.0
      %53 = vst [vmem:[#allocation2 + $0x120] sm:$0xff] 0.0
      %54 = vst [vmem:[#allocation2 + $0x128] sm:$0xff] 0.0
      %55 = vst [vmem:[#allocation2 + $0x130] sm:$0xff] 0.0
      %56 = vst [vmem:[#allocation2 + $0x138] sm:$0xff] 0.0
      %57 = vst [vmem:[#allocation2 + $0x140] sm:$0xff] 0.0
      %58 = vst [vmem:[#allocation2 + $0x148] sm:$0xff] 0.0
      %59 = vst [vmem:[#allocation2 + $0x150] sm:$0xff] 0.0
      %60 = vst [vmem:[#allocation2 + $0x158] sm:$0xff] 0.0
      %61 = vst [vmem:[#allocation2 + $0x160] sm:$0xff] 0.0
      %62 = vst [vmem:[#allocation2 + $0x168] sm:$0xff] 0.0
      %63 = vst [vmem:[#allocation2 + $0x170] sm:$0xff] 0.0
      %64 = vst [vmem:[#allocation2 + $0x178] sm:$0xff] 0.0
      %65 = vst [vmem:[#allocation2 + $0x180] sm:$0xff] 0.0
      %66 = vst [vmem:[#allocation2 + $0x188] sm:$0xff] 0.0
      %67 = vst [vmem:[#allocation2 + $0x190] sm:$0xff] 0.0
      %68 = vst [vmem:[#allocation2 + $0x198] sm:$0xff] 0.0
      %69 = vst [vmem:[#allocation2 + $0x1a0] sm:$0xff] 0.0
      %70 = vst [vmem:[#allocation2 + $0x1a8] sm:$0xff] 0.0
      %71 = vst [vmem:[#allocation2 + $0x1b0] sm:$0xff] 0.0
      %72 = vst [vmem:[#allocation2 + $0x1b8] sm:$0xff] 0.0
      %73 = vst [vmem:[#allocation2 + $0x1c0] sm:$0xff] 0.0
      %74 = vst [vmem:[#allocation2 + $0x1c8] sm:$0xff] 0.0
      %75 = vst [vmem:[#allocation2 + $0x1d0] sm:$0xff] 0.0
      %76 = vst [vmem:[#allocation2 + $0x1d8] sm:$0xff] 0.0
      %77 = vst [vmem:[#allocation2 + $0x1e0] sm:$0xff] 0.0
      %78 = vst [vmem:[#allocation2 + $0x1e8] sm:$0xff] 0.0
      %79 = vst [vmem:[#allocation2 + $0x1f0] sm:$0xff] 0.0
      %80 = vst [vmem:[#allocation2 + $0x1f8] sm:$0xff] 0.0
      %81 = vst [vmem:[#allocation2 + $0x200] sm:$0xff] 0.0
      %82 = vst [vmem:[#allocation2 + $0x208] sm:$0xff] 0.0
      %83 = vst [vmem:[#allocation2 + $0x210] sm:$0xff] 0.0
      %84 = vst [vmem:[#allocation2 + $0x218] sm:$0xff] 0.0
      %85 = vst [vmem:[#allocation2 + $0x220] sm:$0xff] 0.0
      %86 = vst [vmem:[#allocation2 + $0x228] sm:$0xff] 0.0
      %87 = vst [vmem:[#allocation2 + $0x230] sm:$0xff] 0.0
      %88 = vst [vmem:[#allocation2 + $0x238] sm:$0xff] 0.0
      %89 = vst [vmem:[#allocation2 + $0x240] sm:$0xff] 0.0
      %90 = vst [vmem:[#allocation2 + $0x248] sm:$0xff] 0.0
      %91 = vst [vmem:[#allocation2 + $0x250] sm:$0xff] 0.0
      %92 = vst [vmem:[#allocation2 + $0x258] sm:$0xff] 0.0
      %93 = vst [vmem:[#allocation2 + $0x260] sm:$0xff] 0.0
      %94 = vst [vmem:[#allocation2 + $0x268] sm:$0xff] 0.0
      %95 = vst [vmem:[#allocation2 + $0x270] sm:$0xff] 0.0
      %96 = vst [vmem:[#allocation2 + $0x278] sm:$0xff] 0.0
      %97 = vst [vmem:[#allocation2 + $0x280] sm:$0xff] 0.0
      %98 = vst [vmem:[#allocation2 + $0x288] sm:$0xff] 0.0
      %99 = vst [vmem:[#allocation2 + $0x290] sm:$0xff] 0.0
      %100 = vst [vmem:[#allocation2 + $0x298] sm:$0xff] 0.0
      %101 = vst [vmem:[#allocation2 + $0x2a0] sm:$0xff] 0.0
      %102 = vst [vmem:[#allocation2 + $0x2a8] sm:$0xff] 0.0
      %103 = vst [vmem:[#allocation2 + $0x2b0] sm:$0xff] 0.0
      %104 = vst [vmem:[#allocation2 + $0x2b8] sm:$0xff] 0.0
      %105 = vst [vmem:[#allocation2 + $0x2c0] sm:$0xff] 0.0
      %106 = vst [vmem:[#allocation2 + $0x2c8] sm:$0xff] 0.0
      %107 = vst [vmem:[#allocation2 + $0x2d0] sm:$0xff] 0.0
      %108 = vst [vmem:[#allocation2 + $0x2d8] sm:$0xff] 0.0
      %109 = vst [vmem:[#allocation2 + $0x2e0] sm:$0xff] 0.0
      %110 = vst [vmem:[#allocation2 + $0x2e8] sm:$0xff] 0.0
      %111 = vst [vmem:[#allocation2 + $0x2f0] sm:$0xff] 0.0
      %112 = vst [vmem:[#allocation2 + $0x2f8] sm:$0xff] 0.0
      %113 = vst [vmem:[#allocation2 + $0x300] sm:$0xff] 0.0
      %114 = vst [vmem:[#allocation2 + $0x308] sm:$0xff] 0.0
      %115 = vst [vmem:[#allocation2 + $0x310] sm:$0xff] 0.0
      %116 = vst [vmem:[#allocation2 + $0x318] sm:$0xff] 0.0
      %117 = vst [vmem:[#allocation2 + $0x320] sm:$0xff] 0.0
      %118 = vst [vmem:[#allocation2 + $0x328] sm:$0xff] 0.0
      %119 = vst [vmem:[#allocation2 + $0x330] sm:$0xff] 0.0
      %120 = vst [vmem:[#allocation2 + $0x338] sm:$0xff] 0.0
      %121 = vst [vmem:[#allocation2 + $0x340] sm:$0xff] 0.0
      %122 = vst [vmem:[#allocation2 + $0x348] sm:$0xff] 0.0
      %123 = vst [vmem:[#allocation2 + $0x350] sm:$0xff] 0.0
      %124 = vst [vmem:[#allocation2 + $0x358] sm:$0xff] 0.0
      %125 = vst [vmem:[#allocation2 + $0x360] sm:$0xff] 0.0
      %126 = vst [vmem:[#allocation2 + $0x368] sm:$0xff] 0.0
      %127 = vst [vmem:[#allocation2 + $0x370] sm:$0xff] 0.0
      %128 = vst [vmem:[#allocation2 + $0x378] sm:$0xff] 0.0
      %129 = vst [vmem:[#allocation2 + $0x380] sm:$0xff] 0.0
      %130 = vst [vmem:[#allocation2 + $0x388] sm:$0xff] 0.0
      %131 = vst [vmem:[#allocation2 + $0x390] sm:$0xff] 0.0
      %132 = vst [vmem:[#allocation2 + $0x398] sm:$0xff] 0.0
      %133 = vst [vmem:[#allocation2 + $0x3a0] sm:$0xff] 0.0
      %134 = vst [vmem:[#allocation2 + $0x3a8] sm:$0xff] 0.0
      %135 = vst [vmem:[#allocation2 + $0x3b0] sm:$0xff] 0.0
      %136 = vst [vmem:[#allocation2 + $0x3b8] sm:$0xff] 0.0
      %137 = vst [vmem:[#allocation2 + $0x3c0] sm:$0xff] 0.0
      %138 = vst [vmem:[#allocation2 + $0x3c8] sm:$0xff] 0.0
      %139 = vst [vmem:[#allocation2 + $0x3d0] sm:$0xff] 0.0
      %140 = vst [vmem:[#allocation2 + $0x3d8] sm:$0xff] 0.0
      %141 = vst [vmem:[#allocation2 + $0x3e0] sm:$0xff] 0.0
      %142 = vst [vmem:[#allocation2 + $0x3e8] sm:$0xff] 0.0
      %143 = vst [vmem:[#allocation2 + $0x3f0] sm:$0xff] 0.0
      %144 = vst [vmem:[#allocation2 + $0x3f8] sm:$0xff] 0.0
    $region13: #{tpu_custom_call.1} parent=1 // pred_fallthru
      _
    %v145 = vld [vmem:[#allocation2] sm:$0xff]
    %v146 = vld [vmem:[#allocation2 + $0x8] sm:$0xff]
    %v147 = vld [vmem:[#allocation2 + $0x10] sm:$0xff]
    %v148 = vld [vmem:[#allocation2 + $0x18] sm:$0xff]
    %v149 = vld [vmem:[#allocation2 + $0x20] sm:$0xff]
    %v150 = vld [vmem:[#allocation2 + $0x28] sm:$0xff]
    %v151 = vld [vmem:[#allocation2 + $0x30] sm:$0xff]
    %v152 = vld [vmem:[#allocation2 + $0x38] sm:$0xff]
    %v153 = vld [vmem:[#allocation2 + $0x40] sm:$0xff]
    %v154 = vld [vmem:[#allocation2 + $0x48] sm:$0xff]
    %v155 = vld [vmem:[#allocation2 + $0x50] sm:$0xff]
    %v156 = vld [vmem:[#allocation2 + $0x58] sm:$0xff]
    %v157 = vld [vmem:[#allocation2 + $0x60] sm:$0xff]
    %v158 = vld [vmem:[#allocation2 + $0x68] sm:$0xff]
    %v159 = vld [vmem:[#allocation2 + $0x70] sm:$0xff]
    %v160 = vld [vmem:[#allocation2 + $0x78] sm:$0xff]
    %v161 = vld [vmem:[#allocation2 + $0x80] sm:$0xff]
    %v162 = vld [vmem:[#allocation2 + $0x88] sm:$0xff]
    %v163 = vld [vmem:[#allocation2 + $0x90] sm:$0xff]
    %v164 = vld [vmem:[#allocation2 + $0x98] sm:$0xff]
    %v165 = vld [vmem:[#allocation2 + $0xa0] sm:$0xff]
    %v166 = vld [vmem:[#allocation2 + $0xa8] sm:$0xff]
    %v167 = vld [vmem:[#allocation2 + $0xb0] sm:$0xff]
    %v168 = vld [vmem:[#allocation2 + $0xb8] sm:$0xff]
    %v169 = vld [vmem:[#allocation2 + $0xc0] sm:$0xff]
    %v170 = vld [vmem:[#allocation2 + $0xc8] sm:$0xff]
    %v171 = vld [vmem:[#allocation2 + $0xd0] sm:$0xff]
    %v172 = vld [vmem:[#allocation2 + $0xd8] sm:$0xff]
    %v173 = vld [vmem:[#allocation2 + $0xe0] sm:$0xff]
    %v174 = vld [vmem:[#allocation2 + $0xe8] sm:$0xff]
    %v175 = vld [vmem:[#allocation2 + $0xf0] sm:$0xff]
    %v176 = vld [vmem:[#allocation2 + $0xf8] sm:$0xff]
    %v177 = vld [vmem:[#allocation2 + $0x100] sm:$0xff]
    %v178 = vld [vmem:[#allocation2 + $0x108] sm:$0xff]
    %v179 = vld [vmem:[#allocation2 + $0x110] sm:$0xff]
    %v180 = vld [vmem:[#allocation2 + $0x118] sm:$0xff]
    %v181 = vld [vmem:[#allocation2 + $0x120] sm:$0xff]
    %v182 = vld [vmem:[#allocation2 + $0x128] sm:$0xff]
    %v183 = vld [vmem:[#allocation2 + $0x130] sm:$0xff]
    %v184 = vld [vmem:[#allocation2 + $0x138] sm:$0xff]
    %v185 = vld [vmem:[#allocation2 + $0x140] sm:$0xff]
    %v186 = vld [vmem:[#allocation2 + $0x148] sm:$0xff]
    %v187 = vld [vmem:[#allocation2 + $0x150] sm:$0xff]
    %v188 = vld [vmem:[#allocation2 + $0x158] sm:$0xff]
    %v189 = vld [vmem:[#allocation2 + $0x160] sm:$0xff]
    %v190 = vld [vmem:[#allocation2 + $0x168] sm:$0xff]
    %v191 = vld [vmem:[#allocation2 + $0x170] sm:$0xff]
    %v192 = vld [vmem:[#allocation2 + $0x178] sm:$0xff]
    %v193 = vld [vmem:[#allocation2 + $0x180] sm:$0xff]
    %v194 = vld [vmem:[#allocation2 + $0x188] sm:$0xff]
    %v195 = vld [vmem:[#allocation2 + $0x190] sm:$0xff]
    %v196 = vld [vmem:[#allocation2 + $0x198] sm:$0xff]
    %v197 = vld [vmem:[#allocation2 + $0x1a0] sm:$0xff]
    %v198 = vld [vmem:[#allocation2 + $0x1a8] sm:$0xff]
    %v199 = vld [vmem:[#allocation2 + $0x1b0] sm:$0xff]
    %v200 = vld [vmem:[#allocation2 + $0x1b8] sm:$0xff]
    %v201 = vld [vmem:[#allocation2 + $0x1c0] sm:$0xff]
    %v202 = vld [vmem:[#allocation2 + $0x1c8] sm:$0xff]
    %v203 = vld [vmem:[#allocation2 + $0x1d0] sm:$0xff]
    %v204 = vld [vmem:[#allocation2 + $0x1d8] sm:$0xff]
    %v205 = vld [vmem:[#allocation2 + $0x1e0] sm:$0xff]
    %v206 = vld [vmem:[#allocation2 + $0x1e8] sm:$0xff]
    %v207 = vld [vmem:[#allocation2 + $0x1f0] sm:$0xff]
    %v208 = vld [vmem:[#allocation2 + $0x1f8] sm:$0xff]
    %v209 = vld [vmem:[#allocation2 + $0x200] sm:$0xff]
    %v210 = vld [vmem:[#allocation2 + $0x208] sm:$0xff]
    %v211 = vld [vmem:[#allocation2 + $0x210] sm:$0xff]
    %v212 = vld [vmem:[#allocation2 + $0x218] sm:$0xff]
    %v213 = vld [vmem:[#allocation2 + $0x220] sm:$0xff]
    %v214 = vld [vmem:[#allocation2 + $0x228] sm:$0xff]
    %v215 = vld [vmem:[#allocation2 + $0x230] sm:$0xff]
    %v216 = vld [vmem:[#allocation2 + $0x238] sm:$0xff]
    %v217 = vld [vmem:[#allocation2 + $0x240] sm:$0xff]
    %v218 = vld [vmem:[#allocation2 + $0x248] sm:$0xff]
    %v219 = vld [vmem:[#allocation2 + $0x250] sm:$0xff]
    %v220 = vld [vmem:[#allocation2 + $0x258] sm:$0xff]
    %v221 = vld [vmem:[#allocation2 + $0x260] sm:$0xff]
    %v222 = vld [vmem:[#allocation2 + $0x268] sm:$0xff]
    %v223 = vld [vmem:[#allocation2 + $0x270] sm:$0xff]
    %v224 = vld [vmem:[#allocation2 + $0x278] sm:$0xff]
    %v225 = vld [vmem:[#allocation2 + $0x280] sm:$0xff]
    %v226 = vld [vmem:[#allocation2 + $0x288] sm:$0xff]
    %v227 = vld [vmem:[#allocation2 + $0x290] sm:$0xff]
    %v228 = vld [vmem:[#allocation2 + $0x298] sm:$0xff]
    %v229 = vld [vmem:[#allocation2 + $0x2a0] sm:$0xff]
    %v230 = vld [vmem:[#allocation2 + $0x2a8] sm:$0xff]
    %v231 = vld [vmem:[#allocation2 + $0x2b0] sm:$0xff]
    %v232 = vld [vmem:[#allocation2 + $0x2b8] sm:$0xff]
    %v233 = vld [vmem:[#allocation2 + $0x2c0] sm:$0xff]
    %v234 = vld [vmem:[#allocation2 + $0x2c8] sm:$0xff]
    %v235 = vld [vmem:[#allocation2 + $0x2d0] sm:$0xff]
    %v236 = vld [vmem:[#allocation2 + $0x2d8] sm:$0xff]
    %v237 = vld [vmem:[#allocation2 + $0x2e0] sm:$0xff]
    %v238 = vld [vmem:[#allocation2 + $0x2e8] sm:$0xff]
    %v239 = vld [vmem:[#allocation2 + $0x2f0] sm:$0xff]
    %v240 = vld [vmem:[#allocation2 + $0x2f8] sm:$0xff]
    %v241 = vld [vmem:[#allocation2 + $0x300] sm:$0xff]
    %v242 = vld [vmem:[#allocation2 + $0x308] sm:$0xff]
    %v243 = vld [vmem:[#allocation2 + $0x310] sm:$0xff]
    %v244 = vld [vmem:[#allocation2 + $0x318] sm:$0xff]
    %v245 = vld [vmem:[#allocation2 + $0x320] sm:$0xff]
    %v246 = vld [vmem:[#allocation2 + $0x328] sm:$0xff]
    %v247 = vld [vmem:[#allocation2 + $0x330] sm:$0xff]
    %v248 = vld [vmem:[#allocation2 + $0x338] sm:$0xff]
    %v249 = vld [vmem:[#allocation2 + $0x340] sm:$0xff]
    %v250 = vld [vmem:[#allocation2 + $0x348] sm:$0xff]
    %v251 = vld [vmem:[#allocation2 + $0x350] sm:$0xff]
    %v252 = vld [vmem:[#allocation2 + $0x358] sm:$0xff]
    %v253 = vld [vmem:[#allocation2 + $0x360] sm:$0xff]
    %v254 = vld [vmem:[#allocation2 + $0x368] sm:$0xff]
    %v255 = vld [vmem:[#allocation2 + $0x370] sm:$0xff]
    %v256 = vld [vmem:[#allocation2 + $0x378] sm:$0xff]
    %v257 = vld [vmem:[#allocation2 + $0x380] sm:$0xff]
    %v258 = vld [vmem:[#allocation2 + $0x388] sm:$0xff]
    %v259 = vld [vmem:[#allocation2 + $0x390] sm:$0xff]
    %v260 = vld [vmem:[#allocation2 + $0x398] sm:$0xff]
    %v261 = vld [vmem:[#allocation2 + $0x3a0] sm:$0xff]
    %v262 = vld [vmem:[#allocation2 + $0x3a8] sm:$0xff]
    %v263 = vld [vmem:[#allocation2 + $0x3b0] sm:$0xff]
    %v264 = vld [vmem:[#allocation2 + $0x3b8] sm:$0xff]
    %v265 = vld [vmem:[#allocation2 + $0x3c0] sm:$0xff]
    %v266 = vld [vmem:[#allocation2 + $0x3c8] sm:$0xff]
    %v267 = vld [vmem:[#allocation2 + $0x3d0] sm:$0xff]
    %v268 = vld [vmem:[#allocation2 + $0x3d8] sm:$0xff]
    %v269 = vld [vmem:[#allocation2 + $0x3e0] sm:$0xff]
    %v270 = vld [vmem:[#allocation2 + $0x3e8] sm:$0xff]
    %v271 = vld [vmem:[#allocation2 + $0x3f0] sm:$0xff]
    %v272 = vld [vmem:[#allocation2 + $0x3f8] sm:$0xff]
    %v273 = vld [vmem:[%s0] sm:$0xf]
    %v274 = vld [vmem:[%s0 + $0x4] sm:$0xf]
    %v275 = vld [vmem:[%s0 + $0x8] sm:$0xf]
    %v276 = vld [vmem:[%s0 + $0xc] sm:$0xf]
    %v277 = vld [vmem:[%s0 + $0x10] sm:$0xf]
    %v278 = vld [vmem:[%s0 + $0x14] sm:$0xf]
    %v279 = vld [vmem:[%s0 + $0x18] sm:$0xf]
    %v280 = vld [vmem:[%s0 + $0x1c] sm:$0xf]
    %v281 = vld [vmem:[%s0 + $0x20] sm:$0xf]
    %v282 = vld [vmem:[%s0 + $0x24] sm:$0xf]
    %v283 = vld [vmem:[%s0 + $0x28] sm:$0xf]
    %v284 = vld [vmem:[%s0 + $0x2c] sm:$0xf]
    %v285 = vld [vmem:[%s0 + $0x30] sm:$0xf]
    %v286 = vld [vmem:[%s0 + $0x34] sm:$0xf]
    %v287 = vld [vmem:[%s0 + $0x38] sm:$0xf]
    %v288 = vld [vmem:[%s0 + $0x3c] sm:$0xf]
    %v289 = vld [vmem:[%s0 + $0x40] sm:$0xf]
    %v290 = vld [vmem:[%s0 + $0x44] sm:$0xf]
    %v291 = vld [vmem:[%s0 + $0x48] sm:$0xf]
    %v292 = vld [vmem:[%s0 + $0x4c] sm:$0xf]
    %v293 = vld [vmem:[%s0 + $0x50] sm:$0xf]
    %v294 = vld [vmem:[%s0 + $0x54] sm:$0xf]
    %v295 = vld [vmem:[%s0 + $0x58] sm:$0xf]
    %v296 = vld [vmem:[%s0 + $0x5c] sm:$0xf]
    %v297 = vld [vmem:[%s0 + $0x60] sm:$0xf]
    %v298 = vld [vmem:[%s0 + $0x64] sm:$0xf]
    %v299 = vld [vmem:[%s0 + $0x68] sm:$0xf]
    %v300 = vld [vmem:[%s0 + $0x6c] sm:$0xf]
    %v301 = vld [vmem:[%s0 + $0x70] sm:$0xf]
    %v302 = vld [vmem:[%s0 + $0x74] sm:$0xf]
    %v303 = vld [vmem:[%s0 + $0x78] sm:$0xf]
    %v304 = vld [vmem:[%s0 + $0x7c] sm:$0xf]
    %v305 = vld [vmem:[%s1] sm:$0xff]
    %v306 = vld [vmem:[%s1 + $0x8] sm:$0xff]
    %v307 = vld [vmem:[%s1 + $0x10] sm:$0xff]
    %v308 = vld [vmem:[%s1 + $0x18] sm:$0xff]
    %v309 = vld [vmem:[%s1 + $0x20] sm:$0xff]
    %v310 = vld [vmem:[%s1 + $0x28] sm:$0xff]
    %v311 = vld [vmem:[%s1 + $0x30] sm:$0xff]
    %v312 = vld [vmem:[%s1 + $0x38] sm:$0xff]
    %v313 = vld [vmem:[%s1 + $0x40] sm:$0xff]
    %v314 = vld [vmem:[%s1 + $0x48] sm:$0xff]
    %v315 = vld [vmem:[%s1 + $0x50] sm:$0xff]
    %v316 = vld [vmem:[%s1 + $0x58] sm:$0xff]
    %v317 = vld [vmem:[%s1 + $0x60] sm:$0xff]
    %v318 = vld [vmem:[%s1 + $0x68] sm:$0xff]
    %v319 = vld [vmem:[%s1 + $0x70] sm:$0xff]
    %v320 = vld [vmem:[%s1 + $0x78] sm:$0xff]
    %v353 = vunpack.c.l.b16 %v273
    %v354 = vunpack.c.l.b16 %v274
    %v355 = vunpack.c.l.b16 %v275
    %v356 = vunpack.c.l.b16 %v276
    %v357 = vunpack.c.l.b16 %v277
    %v358 = vunpack.c.l.b16 %v278
    %v359 = vunpack.c.l.b16 %v279
    %v360 = vunpack.c.l.b16 %v280
    %v361 = vunpack.c.l.b16 %v281
    %v362 = vunpack.c.l.b16 %v282
    %v363 = vunpack.c.l.b16 %v283
    %v364 = vunpack.c.l.b16 %v284
    %v365 = vunpack.c.l.b16 %v285
    %v366 = vunpack.c.l.b16 %v286
    %v367 = vunpack.c.l.b16 %v287
    %v368 = vunpack.c.l.b16 %v288
    %v369 = vunpack.c.l.b16 %v289
    %v370 = vunpack.c.l.b16 %v290
    %v371 = vunpack.c.l.b16 %v291
    %v372 = vunpack.c.l.b16 %v292
    %v373 = vunpack.c.l.b16 %v293
    %v374 = vunpack.c.l.b16 %v294
    %v375 = vunpack.c.l.b16 %v295
    %v376 = vunpack.c.l.b16 %v296
    %v377 = vunpack.c.l.b16 %v297
    %v378 = vunpack.c.l.b16 %v298
    %v379 = vunpack.c.l.b16 %v299
    %v380 = vunpack.c.l.b16 %v300
    %v381 = vunpack.c.l.b16 %v301
    %v382 = vunpack.c.l.b16 %v302
    %v383 = vunpack.c.l.b16 %v303
    %v384 = vunpack.c.l.b16 %v304
    %v385 = vpack.c.b16 %v354, %v353
    %v386 = vpack.c.b16 %v356, %v355
    %v387 = vpack.c.b16 %v358, %v357
    %v388 = vpack.c.b16 %v360, %v359
    %v389 = vpack.c.b16 %v362, %v361
    %v390 = vpack.c.b16 %v364, %v363
    %v391 = vpack.c.b16 %v366, %v365
    %v392 = vpack.c.b16 %v368, %v367
    %v393 = vpack.c.b16 %v370, %v369
    %v394 = vpack.c.b16 %v372, %v371
    %v395 = vpack.c.b16 %v374, %v373
    %v396 = vpack.c.b16 %v376, %v375
    %v397 = vpack.c.b16 %v378, %v377
    %v398 = vpack.c.b16 %v380, %v379
    %v399 = vpack.c.b16 %v382, %v381
    %v400 = vpack.c.b16 %v384, %v383
    %v417 = vunpack.c.l.b16 %v305
    %v418 = vunpack.c.h.b16 %v305
    %v419 = vunpack.c.l.b16 %v306
    %v420 = vunpack.c.h.b16 %v306
    %v421 = vunpack.c.l.b16 %v307
    %v422 = vunpack.c.h.b16 %v307
    %v423 = vunpack.c.l.b16 %v308
    %v424 = vunpack.c.h.b16 %v308
    %v425 = vunpack.c.l.b16 %v309
    %v426 = vunpack.c.h.b16 %v309
    %v427 = vunpack.c.l.b16 %v310
    %v428 = vunpack.c.h.b16 %v310
    %v429 = vunpack.c.l.b16 %v311
    %v430 = vunpack.c.h.b16 %v311
    %v431 = vunpack.c.l.b16 %v312
    %v432 = vunpack.c.h.b16 %v312
    %v433 = vunpack.c.l.b16 %v313
    %v434 = vunpack.c.h.b16 %v313
    %v435 = vunpack.c.l.b16 %v314
    %v436 = vunpack.c.h.b16 %v314
    %v437 = vunpack.c.l.b16 %v315
    %v438 = vunpack.c.h.b16 %v315
    %v439 = vunpack.c.l.b16 %v316
    %v440 = vunpack.c.h.b16 %v316
    %v441 = vunpack.c.l.b16 %v317
    %v442 = vunpack.c.h.b16 %v317
    %v443 = vunpack.c.l.b16 %v318
    %v444 = vunpack.c.h.b16 %v318
    %v445 = vunpack.c.l.b16 %v319
    %v446 = vunpack.c.h.b16 %v319
    %v447 = vunpack.c.l.b16 %v320
    %v448 = vunpack.c.h.b16 %v320
    %v449 = vpack.c.b16 %v421, %v417
    %v450 = vpack.c.b16 %v422, %v418
    %v451 = vpack.c.b16 %v423, %v419
    %v452 = vpack.c.b16 %v424, %v420
    %v453 = vpack.c.b16 %v429, %v425
    %v454 = vpack.c.b16 %v430, %v426
    %v455 = vpack.c.b16 %v431, %v427
    %v456 = vpack.c.b16 %v432, %v428
    %v457 = vpack.c.b16 %v437, %v433
    %v458 = vpack.c.b16 %v438, %v434
    %v459 = vpack.c.b16 %v439, %v435
    %v460 = vpack.c.b16 %v440, %v436
    %v461 = vpack.c.b16 %v445, %v441
    %v462 = vpack.c.b16 %v446, %v442
    %v463 = vpack.c.b16 %v447, %v443
    %v464 = vpack.c.b16 %v448, %v444
    %vm481 = vcmask 523264
    %v483 = vsel %vm481, %v385, 0
    %v486 = vsel %vm481, %v386, 0
    %v489 = vsel %vm481, %v387, 0
    %v492 = vsel %vm481, %v388, 0
    %v495 = vsel %vm481, %v389, 0
    %v498 = vsel %vm481, %v390, 0
    %v501 = vsel %vm481, %v391, 0
    %v504 = vsel %vm481, %v392, 0
    %v507 = vsel %vm481, %v393, 0
    %v510 = vsel %vm481, %v394, 0
    %v513 = vsel %vm481, %v395, 0
    %v516 = vsel %vm481, %v396, 0
    %v519 = vsel %vm481, %v397, 0
    %v522 = vsel %vm481, %v398, 0
    %v525 = vsel %vm481, %v399, 0
    %v528 = vsel %vm481, %v400, 0
    %530 = vmatpush.bf16.msra.mxu0 0
    %531 = vmatpush.bf16.msra.mxu0 0
    %532 = vmatpush.bf16.msra.mxu0 0
    %533 = vmatpush.bf16.msra.mxu0 0
    %534 = vmatpush.bf16.msra.mxu0 %v461
    %535 = vmatpush.bf16.msra.mxu0 %v457
    %536 = vmatpush.bf16.msra.mxu0 %v453
    %537 = vmatpush.bf16.msra.mxu0 %v449
    %538 = vmatmul.bf16.gmra.mxu0 %v483
    %v539 = vpop.f32.mrf.mxu0
    %v540 = vadd.f32 0.0, %v539
    %v541 = vpop.f32.mrf.mxu0
    %v542 = vadd.f32 0.0, %v541
    %543 = vmatmul.bf16.gmra.mxu0 %v486
    %v544 = vpop.f32.mrf.mxu0
    %v545 = vadd.f32 0.0, %v544
    %v546 = vpop.f32.mrf.mxu0
    %v547 = vadd.f32 0.0, %v546
    %548 = vmatmul.bf16.gmra.mxu0 %v489
    %v549 = vpop.f32.mrf.mxu0
    %v550 = vadd.f32 0.0, %v549
    %v551 = vpop.f32.mrf.mxu0
    %v552 = vadd.f32 0.0, %v551
    %553 = vmatmul.bf16.gmra.mxu0 %v492
    %v554 = vpop.f32.mrf.mxu0
    %v555 = vadd.f32 0.0, %v554
    %v556 = vpop.f32.mrf.mxu0
    %v557 = vadd.f32 0.0, %v556
    %558 = vmatmul.bf16.gmra.mxu0 %v495
    %v559 = vpop.f32.mrf.mxu0
    %v560 = vadd.f32 0.0, %v559
    %v561 = vpop.f32.mrf.mxu0
    %v562 = vadd.f32 0.0, %v561
    %563 = vmatmul.bf16.gmra.mxu0 %v498
    %v564 = vpop.f32.mrf.mxu0
    %v565 = vadd.f32 0.0, %v564
    %v566 = vpop.f32.mrf.mxu0
    %v567 = vadd.f32 0.0, %v566
    %568 = vmatmul.bf16.gmra.mxu0 %v501
    %v569 = vpop.f32.mrf.mxu0
    %v570 = vadd.f32 0.0, %v569
    %v571 = vpop.f32.mrf.mxu0
    %v572 = vadd.f32 0.0, %v571
    %573 = vmatmul.bf16.gmra.mxu0 %v504
    %v574 = vpop.f32.mrf.mxu0
    %v575 = vadd.f32 0.0, %v574
    %v576 = vpop.f32.mrf.mxu0
    %v577 = vadd.f32 0.0, %v576
    %578 = vmatmul.bf16.gmra.mxu0 %v507
    %v579 = vpop.f32.mrf.mxu0
    %v580 = vadd.f32 0.0, %v579
    %v581 = vpop.f32.mrf.mxu0
    %v582 = vadd.f32 0.0, %v581
    %583 = vmatmul.bf16.gmra.mxu0 %v510
    %v584 = vpop.f32.mrf.mxu0
    %v585 = vadd.f32 0.0, %v584
    %v586 = vpop.f32.mrf.mxu0
    %v587 = vadd.f32 0.0, %v586
    %588 = vmatmul.bf16.gmra.mxu0 %v513
    %v589 = vpop.f32.mrf.mxu0
    %v590 = vadd.f32 0.0, %v589
    %v591 = vpop.f32.mrf.mxu0
    %v592 = vadd.f32 0.0, %v591
    %593 = vmatmul.bf16.gmra.mxu0 %v516
    %v594 = vpop.f32.mrf.mxu0
    %v595 = vadd.f32 0.0, %v594
    %v596 = vpop.f32.mrf.mxu0
    %v597 = vadd.f32 0.0, %v596
    %598 = vmatmul.bf16.gmra.mxu0 %v519
    %v599 = vpop.f32.mrf.mxu0
    %v600 = vadd.f32 0.0, %v599
    %v601 = vpop.f32.mrf.mxu0
    %v602 = vadd.f32 0.0, %v601
    %603 = vmatmul.bf16.gmra.mxu0 %v522
    %v604 = vpop.f32.mrf.mxu0
    %v605 = vadd.f32 0.0, %v604
    %v606 = vpop.f32.mrf.mxu0
    %v607 = vadd.f32 0.0, %v606
    %608 = vmatmul.bf16.gmra.mxu0 %v525
    %v609 = vpop.f32.mrf.mxu0
    %v610 = vadd.f32 0.0, %v609
    %v611 = vpop.f32.mrf.mxu0
    %v612 = vadd.f32 0.0, %v611
    %613 = vmatmul.bf16.gmra.mxu0 %v528
    %v614 = vpop.f32.mrf.mxu0
    %v615 = vadd.f32 0.0, %v614
    %v616 = vpop.f32.mrf.mxu0
    %v617 = vadd.f32 0.0, %v616
    %618 = vdwg.mxu0
    %619 = vmatpush.bf16.msra.mxu0 0
    %620 = vmatpush.bf16.msra.mxu0 0
    %621 = vmatpush.bf16.msra.mxu0 0
    %622 = vmatpush.bf16.msra.mxu0 0
    %623 = vmatpush.bf16.msra.mxu0 %v462
    %624 = vmatpush.bf16.msra.mxu0 %v458
    %625 = vmatpush.bf16.msra.mxu0 %v454
    %626 = vmatpush.bf16.msra.mxu0 %v450
    %627 = vmatmul.bf16.gmra.mxu0 %v483
    %v628 = vpop.f32.mrf.mxu0
    %v629 = vadd.f32 0.0, %v628
    %v630 = vpop.f32.mrf.mxu0
    %v631 = vadd.f32 0.0, %v630
    %632 = vmatmul.bf16.gmra.mxu0 %v486
    %v633 = vpop.f32.mrf.mxu0
    %v634 = vadd.f32 0.0, %v633
    %v635 = vpop.f32.mrf.mxu0
    %v636 = vadd.f32 0.0, %v635
    %637 = vmatmul.bf16.gmra.mxu0 %v489
    %v638 = vpop.f32.mrf.mxu0
    %v639 = vadd.f32 0.0, %v638
    %v640 = vpop.f32.mrf.mxu0
    %v641 = vadd.f32 0.0, %v640
    %642 = vmatmul.bf16.gmra.mxu0 %v492
    %v643 = vpop.f32.mrf.mxu0
    %v644 = vadd.f32 0.0, %v643
    %v645 = vpop.f32.mrf.mxu0
    %v646 = vadd.f32 0.0, %v645
    %647 = vmatmul.bf16.gmra.mxu0 %v495
    %v648 = vpop.f32.mrf.mxu0
    %v649 = vadd.f32 0.0, %v648
    %v650 = vpop.f32.mrf.mxu0
    %v651 = vadd.f32 0.0, %v650
    %652 = vmatmul.bf16.gmra.mxu0 %v498
    %v653 = vpop.f32.mrf.mxu0
    %v654 = vadd.f32 0.0, %v653
    %v655 = vpop.f32.mrf.mxu0
    %v656 = vadd.f32 0.0, %v655
    %657 = vmatmul.bf16.gmra.mxu0 %v501
    %v658 = vpop.f32.mrf.mxu0
    %v659 = vadd.f32 0.0, %v658
    %v660 = vpop.f32.mrf.mxu0
    %v661 = vadd.f32 0.0, %v660
    %662 = vmatmul.bf16.gmra.mxu0 %v504
    %v663 = vpop.f32.mrf.mxu0
    %v664 = vadd.f32 0.0, %v663
    %v665 = vpop.f32.mrf.mxu0
    %v666 = vadd.f32 0.0, %v665
    %667 = vmatmul.bf16.gmra.mxu0 %v507
    %v668 = vpop.f32.mrf.mxu0
    %v669 = vadd.f32 0.0, %v668
    %v670 = vpop.f32.mrf.mxu0
    %v671 = vadd.f32 0.0, %v670
    %672 = vmatmul.bf16.gmra.mxu0 %v510
    %v673 = vpop.f32.mrf.mxu0
    %v674 = vadd.f32 0.0, %v673
    %v675 = vpop.f32.mrf.mxu0
    %v676 = vadd.f32 0.0, %v675
    %677 = vmatmul.bf16.gmra.mxu0 %v513
    %v678 = vpop.f32.mrf.mxu0
    %v679 = vadd.f32 0.0, %v678
    %v680 = vpop.f32.mrf.mxu0
    %v681 = vadd.f32 0.0, %v680
    %682 = vmatmul.bf16.gmra.mxu0 %v516
    %v683 = vpop.f32.mrf.mxu0
    %v684 = vadd.f32 0.0, %v683
    %v685 = vpop.f32.mrf.mxu0
    %v686 = vadd.f32 0.0, %v685
    %687 = vmatmul.bf16.gmra.mxu0 %v519
    %v688 = vpop.f32.mrf.mxu0
    %v689 = vadd.f32 0.0, %v688
    %v690 = vpop.f32.mrf.mxu0
    %v691 = vadd.f32 0.0, %v690
    %692 = vmatmul.bf16.gmra.mxu0 %v522
    %v693 = vpop.f32.mrf.mxu0
    %v694 = vadd.f32 0.0, %v693
    %v695 = vpop.f32.mrf.mxu0
    %v696 = vadd.f32 0.0, %v695
    %697 = vmatmul.bf16.gmra.mxu0 %v525
    %v698 = vpop.f32.mrf.mxu0
    %v699 = vadd.f32 0.0, %v698
    %v700 = vpop.f32.mrf.mxu0
    %v701 = vadd.f32 0.0, %v700
    %702 = vmatmul.bf16.gmra.mxu0 %v528
    %v703 = vpop.f32.mrf.mxu0
    %v704 = vadd.f32 0.0, %v703
    %v705 = vpop.f32.mrf.mxu0
    %v706 = vadd.f32 0.0, %v705
    %707 = vdwg.mxu0
    %708 = vmatpush.bf16.msra.mxu0 0
    %709 = vmatpush.bf16.msra.mxu0 0
    %710 = vmatpush.bf16.msra.mxu0 0
    %711 = vmatpush.bf16.msra.mxu0 0
    %712 = vmatpush.bf16.msra.mxu0 %v463
    %713 = vmatpush.bf16.msra.mxu0 %v459
    %714 = vmatpush.bf16.msra.mxu0 %v455
    %715 = vmatpush.bf16.msra.mxu0 %v451
    %716 = vmatmul.bf16.gmra.mxu0 %v483
    %v717 = vpop.f32.mrf.mxu0
    %v718 = vadd.f32 0.0, %v717
    %v719 = vpop.f32.mrf.mxu0
    %v720 = vadd.f32 0.0, %v719
    %721 = vmatmul.bf16.gmra.mxu0 %v486
    %v722 = vpop.f32.mrf.mxu0
    %v723 = vadd.f32 0.0, %v722
    %v724 = vpop.f32.mrf.mxu0
    %v725 = vadd.f32 0.0, %v724
    %726 = vmatmul.bf16.gmra.mxu0 %v489
    %v727 = vpop.f32.mrf.mxu0
    %v728 = vadd.f32 0.0, %v727
    %v729 = vpop.f32.mrf.mxu0
    %v730 = vadd.f32 0.0, %v729
    %731 = vmatmul.bf16.gmra.mxu0 %v492
    %v732 = vpop.f32.mrf.mxu0
    %v733 = vadd.f32 0.0, %v732
    %v734 = vpop.f32.mrf.mxu0
    %v735 = vadd.f32 0.0, %v734
    %736 = vmatmul.bf16.gmra.mxu0 %v495
    %v737 = vpop.f32.mrf.mxu0
    %v738 = vadd.f32 0.0, %v737
    %v739 = vpop.f32.mrf.mxu0
    %v740 = vadd.f32 0.0, %v739
    %741 = vmatmul.bf16.gmra.mxu0 %v498
    %v742 = vpop.f32.mrf.mxu0
    %v743 = vadd.f32 0.0, %v742
    %v744 = vpop.f32.mrf.mxu0
    %v745 = vadd.f32 0.0, %v744
    %746 = vmatmul.bf16.gmra.mxu0 %v501
    %v747 = vpop.f32.mrf.mxu0
    %v748 = vadd.f32 0.0, %v747
    %v749 = vpop.f32.mrf.mxu0
    %v750 = vadd.f32 0.0, %v749
    %751 = vmatmul.bf16.gmra.mxu0 %v504
    %v752 = vpop.f32.mrf.mxu0
    %v753 = vadd.f32 0.0, %v752
    %v754 = vpop.f32.mrf.mxu0
    %v755 = vadd.f32 0.0, %v754
    %756 = vmatmul.bf16.gmra.mxu0 %v507
    %v757 = vpop.f32.mrf.mxu0
    %v758 = vadd.f32 0.0, %v757
    %v759 = vpop.f32.mrf.mxu0
    %v760 = vadd.f32 0.0, %v759
    %761 = vmatmul.bf16.gmra.mxu0 %v510
    %v762 = vpop.f32.mrf.mxu0
    %v763 = vadd.f32 0.0, %v762
    %v764 = vpop.f32.mrf.mxu0
    %v765 = vadd.f32 0.0, %v764
    %766 = vmatmul.bf16.gmra.mxu0 %v513
    %v767 = vpop.f32.mrf.mxu0
    %v768 = vadd.f32 0.0, %v767
    %v769 = vpop.f32.mrf.mxu0
    %v770 = vadd.f32 0.0, %v769
    %771 = vmatmul.bf16.gmra.mxu0 %v516
    %v772 = vpop.f32.mrf.mxu0
    %v773 = vadd.f32 0.0, %v772
    %v774 = vpop.f32.mrf.mxu0
    %v775 = vadd.f32 0.0, %v774
    %776 = vmatmul.bf16.gmra.mxu0 %v519
    %v777 = vpop.f32.mrf.mxu0
    %v778 = vadd.f32 0.0, %v777
    %v779 = vpop.f32.mrf.mxu0
    %v780 = vadd.f32 0.0, %v779
    %781 = vmatmul.bf16.gmra.mxu0 %v522
    %v782 = vpop.f32.mrf.mxu0
    %v783 = vadd.f32 0.0, %v782
    %v784 = vpop.f32.mrf.mxu0
    %v785 = vadd.f32 0.0, %v784
    %786 = vmatmul.bf16.gmra.mxu0 %v525
    %v787 = vpop.f32.mrf.mxu0
    %v788 = vadd.f32 0.0, %v787
    %v789 = vpop.f32.mrf.mxu0
    %v790 = vadd.f32 0.0, %v789
    %791 = vmatmul.bf16.gmra.mxu0 %v528
    %v792 = vpop.f32.mrf.mxu0
    %v793 = vadd.f32 0.0, %v792
    %v794 = vpop.f32.mrf.mxu0
    %v795 = vadd.f32 0.0, %v794
    %796 = vdwg.mxu0
    %797 = vmatpush.bf16.msra.mxu0 0
    %798 = vmatpush.bf16.msra.mxu0 0
    %799 = vmatpush.bf16.msra.mxu0 0
    %800 = vmatpush.bf16.msra.mxu0 0
    %801 = vmatpush.bf16.msra.mxu0 %v464
    %802 = vmatpush.bf16.msra.mxu0 %v460
    %803 = vmatpush.bf16.msra.mxu0 %v456
    %804 = vmatpush.bf16.msra.mxu0 %v452
    %805 = vmatmul.bf16.gmra.mxu0 %v483
    %v806 = vpop.f32.mrf.mxu0
    %v807 = vadd.f32 0.0, %v806
    %v808 = vpop.f32.mrf.mxu0
    %v809 = vadd.f32 0.0, %v808
    %810 = vmatmul.bf16.gmra.mxu0 %v486
    %v811 = vpop.f32.mrf.mxu0
    %v812 = vadd.f32 0.0, %v811
    %v813 = vpop.f32.mrf.mxu0
    %v814 = vadd.f32 0.0, %v813
    %815 = vmatmul.bf16.gmra.mxu0 %v489
    %v816 = vpop.f32.mrf.mxu0
    %v817 = vadd.f32 0.0, %v816
    %v818 = vpop.f32.mrf.mxu0
    %v819 = vadd.f32 0.0, %v818
    %820 = vmatmul.bf16.gmra.mxu0 %v492
    %v821 = vpop.f32.mrf.mxu0
    %v822 = vadd.f32 0.0, %v821
    %v823 = vpop.f32.mrf.mxu0
    %v824 = vadd.f32 0.0, %v823
    %825 = vmatmul.bf16.gmra.mxu0 %v495
    %v826 = vpop.f32.mrf.mxu0
    %v827 = vadd.f32 0.0, %v826
    %v828 = vpop.f32.mrf.mxu0
    %v829 = vadd.f32 0.0, %v828
    %830 = vmatmul.bf16.gmra.mxu0 %v498
    %v831 = vpop.f32.mrf.mxu0
    %v832 = vadd.f32 0.0, %v831
    %v833 = vpop.f32.mrf.mxu0
    %v834 = vadd.f32 0.0, %v833
    %835 = vmatmul.bf16.gmra.mxu0 %v501
    %v836 = vpop.f32.mrf.mxu0
    %v837 = vadd.f32 0.0, %v836
    %v838 = vpop.f32.mrf.mxu0
    %v839 = vadd.f32 0.0, %v838
    %840 = vmatmul.bf16.gmra.mxu0 %v504
    %v841 = vpop.f32.mrf.mxu0
    %v842 = vadd.f32 0.0, %v841
    %v843 = vpop.f32.mrf.mxu0
    %v844 = vadd.f32 0.0, %v843
    %845 = vmatmul.bf16.gmra.mxu0 %v507
    %v846 = vpop.f32.mrf.mxu0
    %v847 = vadd.f32 0.0, %v846
    %v848 = vpop.f32.mrf.mxu0
    %v849 = vadd.f32 0.0, %v848
    %850 = vmatmul.bf16.gmra.mxu0 %v510
    %v851 = vpop.f32.mrf.mxu0
    %v852 = vadd.f32 0.0, %v851
    %v853 = vpop.f32.mrf.mxu0
    %v854 = vadd.f32 0.0, %v853
    %855 = vmatmul.bf16.gmra.mxu0 %v513
    %v856 = vpop.f32.mrf.mxu0
    %v857 = vadd.f32 0.0, %v856
    %v858 = vpop.f32.mrf.mxu0
    %v859 = vadd.f32 0.0, %v858
    %860 = vmatmul.bf16.gmra.mxu0 %v516
    %v861 = vpop.f32.mrf.mxu0
    %v862 = vadd.f32 0.0, %v861
    %v863 = vpop.f32.mrf.mxu0
    %v864 = vadd.f32 0.0, %v863
    %865 = vmatmul.bf16.gmra.mxu0 %v519
    %v866 = vpop.f32.mrf.mxu0
    %v867 = vadd.f32 0.0, %v866
    %v868 = vpop.f32.mrf.mxu0
    %v869 = vadd.f32 0.0, %v868
    %870 = vmatmul.bf16.gmra.mxu0 %v522
    %v871 = vpop.f32.mrf.mxu0
    %v872 = vadd.f32 0.0, %v871
    %v873 = vpop.f32.mrf.mxu0
    %v874 = vadd.f32 0.0, %v873
    %875 = vmatmul.bf16.gmra.mxu0 %v525
    %v876 = vpop.f32.mrf.mxu0
    %v877 = vadd.f32 0.0, %v876
    %v878 = vpop.f32.mrf.mxu0
    %v879 = vadd.f32 0.0, %v878
    %880 = vmatmul.bf16.gmra.mxu0 %v528
    %v881 = vpop.f32.mrf.mxu0
    %v882 = vadd.f32 0.0, %v881
    %v883 = vpop.f32.mrf.mxu0
    %v884 = vadd.f32 0.0, %v883
    %885 = vdwg.mxu0
    %v886 = vadd.f32 %v145, %v540
    %v887 = vadd.f32 %v146, %v629
    %v888 = vadd.f32 %v147, %v718
    %v889 = vadd.f32 %v148, %v807
    %v890 = vadd.f32 %v149, %v542
    %v891 = vadd.f32 %v150, %v631
    %v892 = vadd.f32 %v151, %v720
    %v893 = vadd.f32 %v152, %v809
    %v894 = vadd.f32 %v153, %v545
    %v895 = vadd.f32 %v154, %v634
    %v896 = vadd.f32 %v155, %v723
    %v897 = vadd.f32 %v156, %v812
    %v898 = vadd.f32 %v157, %v547
    %v899 = vadd.f32 %v158, %v636
    %v900 = vadd.f32 %v159, %v725
    %v901 = vadd.f32 %v160, %v814
    %v902 = vadd.f32 %v161, %v550
    %v903 = vadd.f32 %v162, %v639
    %v904 = vadd.f32 %v163, %v728
    %v905 = vadd.f32 %v164, %v817
    %v906 = vadd.f32 %v165, %v552
    %v907 = vadd.f32 %v166, %v641
    %v908 = vadd.f32 %v167, %v730
    %v909 = vadd.f32 %v168, %v819
    %v910 = vadd.f32 %v169, %v555
    %v911 = vadd.f32 %v170, %v644
    %v912 = vadd.f32 %v171, %v733
    %v913 = vadd.f32 %v172, %v822
    %v914 = vadd.f32 %v173, %v557
    %v915 = vadd.f32 %v174, %v646
    %v916 = vadd.f32 %v175, %v735
    %v917 = vadd.f32 %v176, %v824
    %v918 = vadd.f32 %v177, %v560
    %v919 = vadd.f32 %v178, %v649
    %v920 = vadd.f32 %v179, %v738
    %v921 = vadd.f32 %v180, %v827
    %v922 = vadd.f32 %v181, %v562
    %v923 = vadd.f32 %v182, %v651
    %v924 = vadd.f32 %v183, %v740
    %v925 = vadd.f32 %v184, %v829
    %v926 = vadd.f32 %v185, %v565
    %v927 = vadd.f32 %v186, %v654
    %v928 = vadd.f32 %v187, %v743
    %v929 = vadd.f32 %v188, %v832
    %v930 = vadd.f32 %v189, %v567
    %v931 = vadd.f32 %v190, %v656
    %v932 = vadd.f32 %v191, %v745
    %v933 = vadd.f32 %v192, %v834
    %v934 = vadd.f32 %v193, %v570
    %v935 = vadd.f32 %v194, %v659
    %v936 = vadd.f32 %v195, %v748
    %v937 = vadd.f32 %v196, %v837
    %v938 = vadd.f32 %v197, %v572
    %v939 = vadd.f32 %v198, %v661
    %v940 = vadd.f32 %v199, %v750
    %v941 = vadd.f32 %v200, %v839
    %v942 = vadd.f32 %v201, %v575
    %v943 = vadd.f32 %v202, %v664
    %v944 = vadd.f32 %v203, %v753
    %v945 = vadd.f32 %v204, %v842
    %v946 = vadd.f32 %v205, %v577
    %v947 = vadd.f32 %v206, %v666
    %v948 = vadd.f32 %v207, %v755
    %v949 = vadd.f32 %v208, %v844
    %v950 = vadd.f32 %v209, %v580
    %v951 = vadd.f32 %v210, %v669
    %v952 = vadd.f32 %v211, %v758
    %v953 = vadd.f32 %v212, %v847
    %v954 = vadd.f32 %v213, %v582
    %v955 = vadd.f32 %v214, %v671
    %v956 = vadd.f32 %v215, %v760
    %v957 = vadd.f32 %v216, %v849
    %v958 = vadd.f32 %v217, %v585
    %v959 = vadd.f32 %v218, %v674
    %v960 = vadd.f32 %v219, %v763
    %v961 = vadd.f32 %v220, %v852
    %v962 = vadd.f32 %v221, %v587
    %v963 = vadd.f32 %v222, %v676
    %v964 = vadd.f32 %v223, %v765
    %v965 = vadd.f32 %v224, %v854
    %v966 = vadd.f32 %v225, %v590
    %v967 = vadd.f32 %v226, %v679
    %v968 = vadd.f32 %v227, %v768
    %v969 = vadd.f32 %v228, %v857
    %v970 = vadd.f32 %v229, %v592
    %v971 = vadd.f32 %v230, %v681
    %v972 = vadd.f32 %v231, %v770
    %v973 = vadd.f32 %v232, %v859
    %v974 = vadd.f32 %v233, %v595
    %v975 = vadd.f32 %v234, %v684
    %v976 = vadd.f32 %v235, %v773
    %v977 = vadd.f32 %v236, %v862
    %v978 = vadd.f32 %v237, %v597
    %v979 = vadd.f32 %v238, %v686
    %v980 = vadd.f32 %v239, %v775
    %v981 = vadd.f32 %v240, %v864
    %v982 = vadd.f32 %v241, %v600
    %v983 = vadd.f32 %v242, %v689
    %v984 = vadd.f32 %v243, %v778
    %v985 = vadd.f32 %v244, %v867
    %v986 = vadd.f32 %v245, %v602
    %v987 = vadd.f32 %v246, %v691
    %v988 = vadd.f32 %v247, %v780
    %v989 = vadd.f32 %v248, %v869
    %v990 = vadd.f32 %v249, %v605
    %v991 = vadd.f32 %v250, %v694
    %v992 = vadd.f32 %v251, %v783
    %v993 = vadd.f32 %v252, %v872
    %v994 = vadd.f32 %v253, %v607
    %v995 = vadd.f32 %v254, %v696
    %v996 = vadd.f32 %v255, %v785
    %v997 = vadd.f32 %v256, %v874
    %v998 = vadd.f32 %v257, %v610
    %v999 = vadd.f32 %v258, %v699
    %v1000 = vadd.f32 %v259, %v788
    %v1001 = vadd.f32 %v260, %v877
    %v1002 = vadd.f32 %v261, %v612
    %v1003 = vadd.f32 %v262, %v701
    %v1004 = vadd.f32 %v263, %v790
    %v1005 = vadd.f32 %v264, %v879
    %v1006 = vadd.f32 %v265, %v615
    %v1007 = vadd.f32 %v266, %v704
    %v1008 = vadd.f32 %v267, %v793
    %v1009 = vadd.f32 %v268, %v882
    %v1010 = vadd.f32 %v269, %v617
    %v1011 = vadd.f32 %v270, %v706
    %v1012 = vadd.f32 %v271, %v795
    %v1013 = vadd.f32 %v272, %v884
    %1014 = vst [vmem:[#allocation2] sm:$0xff] %v886
    %1015 = vst [vmem:[#allocation2 + $0x8] sm:$0xff] %v887
    %1016 = vst [vmem:[#allocation2 + $0x10] sm:$0xff] %v888
    %1017 = vst [vmem:[#allocation2 + $0x18] sm:$0xff] %v889
    %1018 = vst [vmem:[#allocation2 + $0x20] sm:$0xff] %v890
    %1019 = vst [vmem:[#allocation2 + $0x28] sm:$0xff] %v891
    %1020 = vst [vmem:[#allocation2 + $0x30] sm:$0xff] %v892
    %1021 = vst [vmem:[#allocation2 + $0x38] sm:$0xff] %v893
    %1022 = vst [vmem:[#allocation2 + $0x40] sm:$0xff] %v894
    %1023 = vst [vmem:[#allocation2 + $0x48] sm:$0xff] %v895
    %1024 = vst [vmem:[#allocation2 + $0x50] sm:$0xff] %v896
    %1025 = vst [vmem:[#allocation2 + $0x58] sm:$0xff] %v897
    %1026 = vst [vmem:[#allocation2 + $0x60] sm:$0xff] %v898
    %1027 = vst [vmem:[#allocation2 + $0x68] sm:$0xff] %v899
    %1028 = vst [vmem:[#allocation2 + $0x70] sm:$0xff] %v900
    %1029 = vst [vmem:[#allocation2 + $0x78] sm:$0xff] %v901
    %1030 = vst [vmem:[#allocation2 + $0x80] sm:$0xff] %v902
    %1031 = vst [vmem:[#allocation2 + $0x88] sm:$0xff] %v903
    %1032 = vst [vmem:[#allocation2 + $0x90] sm:$0xff] %v904
    %1033 = vst [vmem:[#allocation2 + $0x98] sm:$0xff] %v905
    %1034 = vst [vmem:[#allocation2 + $0xa0] sm:$0xff] %v906
    %1035 = vst [vmem:[#allocation2 + $0xa8] sm:$0xff] %v907
    %1036 = vst [vmem:[#allocation2 + $0xb0] sm:$0xff] %v908
    %1037 = vst [vmem:[#allocation2 + $0xb8] sm:$0xff] %v909
    %1038 = vst [vmem:[#allocation2 + $0xc0] sm:$0xff] %v910
    %1039 = vst [vmem:[#allocation2 + $0xc8] sm:$0xff] %v911
    %1040 = vst [vmem:[#allocation2 + $0xd0] sm:$0xff] %v912
    %1041 = vst [vmem:[#allocation2 + $0xd8] sm:$0xff] %v913
    %1042 = vst [vmem:[#allocation2 + $0xe0] sm:$0xff] %v914
    %1043 = vst [vmem:[#allocation2 + $0xe8] sm:$0xff] %v915
    %1044 = vst [vmem:[#allocation2 + $0xf0] sm:$0xff] %v916
    %1045 = vst [vmem:[#allocation2 + $0xf8] sm:$0xff] %v917
    %1046 = vst [vmem:[#allocation2 + $0x100] sm:$0xff] %v918
    %1047 = vst [vmem:[#allocation2 + $0x108] sm:$0xff] %v919
    %1048 = vst [vmem:[#allocation2 + $0x110] sm:$0xff] %v920
    %1049 = vst [vmem:[#allocation2 + $0x118] sm:$0xff] %v921
    %1050 = vst [vmem:[#allocation2 + $0x120] sm:$0xff] %v922
    %1051 = vst [vmem:[#allocation2 + $0x128] sm:$0xff] %v923
    %1052 = vst [vmem:[#allocation2 + $0x130] sm:$0xff] %v924
    %1053 = vst [vmem:[#allocation2 + $0x138] sm:$0xff] %v925
    %1054 = vst [vmem:[#allocation2 + $0x140] sm:$0xff] %v926
    %1055 = vst [vmem:[#allocation2 + $0x148] sm:$0xff] %v927
    %1056 = vst [vmem:[#allocation2 + $0x150] sm:$0xff] %v928
    %1057 = vst [vmem:[#allocation2 + $0x158] sm:$0xff] %v929
    %1058 = vst [vmem:[#allocation2 + $0x160] sm:$0xff] %v930
    %1059 = vst [vmem:[#allocation2 + $0x168] sm:$0xff] %v931
    %1060 = vst [vmem:[#allocation2 + $0x170] sm:$0xff] %v932
    %1061 = vst [vmem:[#allocation2 + $0x178] sm:$0xff] %v933
    %1062 = vst [vmem:[#allocation2 + $0x180] sm:$0xff] %v934
    %1063 = vst [vmem:[#allocation2 + $0x188] sm:$0xff] %v935
    %1064 = vst [vmem:[#allocation2 + $0x190] sm:$0xff] %v936
    %1065 = vst [vmem:[#allocation2 + $0x198] sm:$0xff] %v937
    %1066 = vst [vmem:[#allocation2 + $0x1a0] sm:$0xff] %v938
    %1067 = vst [vmem:[#allocation2 + $0x1a8] sm:$0xff] %v939
    %1068 = vst [vmem:[#allocation2 + $0x1b0] sm:$0xff] %v940
    %1069 = vst [vmem:[#allocation2 + $0x1b8] sm:$0xff] %v941
    %1070 = vst [vmem:[#allocation2 + $0x1c0] sm:$0xff] %v942
    %1071 = vst [vmem:[#allocation2 + $0x1c8] sm:$0xff] %v943
    %1072 = vst [vmem:[#allocation2 + $0x1d0] sm:$0xff] %v944
    %1073 = vst [vmem:[#allocation2 + $0x1d8] sm:$0xff] %v945
    %1074 = vst [vmem:[#allocation2 + $0x1e0] sm:$0xff] %v946
    %1075 = vst [vmem:[#allocation2 + $0x1e8] sm:$0xff] %v947
    %1076 = vst [vmem:[#allocation2 + $0x1f0] sm:$0xff] %v948
    %1077 = vst [vmem:[#allocation2 + $0x1f8] sm:$0xff] %v949
    %1078 = vst [vmem:[#allocation2 + $0x200] sm:$0xff] %v950
    %1079 = vst [vmem:[#allocation2 + $0x208] sm:$0xff] %v951
    %1080 = vst [vmem:[#allocation2 + $0x210] sm:$0xff] %v952
    %1081 = vst [vmem:[#allocation2 + $0x218] sm:$0xff] %v953
    %1082 = vst [vmem:[#allocation2 + $0x220] sm:$0xff] %v954
    %1083 = vst [vmem:[#allocation2 + $0x228] sm:$0xff] %v955
    %1084 = vst [vmem:[#allocation2 + $0x230] sm:$0xff] %v956
    %1085 = vst [vmem:[#allocation2 + $0x238] sm:$0xff] %v957
    %1086 = vst [vmem:[#allocation2 + $0x240] sm:$0xff] %v958
    %1087 = vst [vmem:[#allocation2 + $0x248] sm:$0xff] %v959
    %1088 = vst [vmem:[#allocation2 + $0x250] sm:$0xff] %v960
    %1089 = vst [vmem:[#allocation2 + $0x258] sm:$0xff] %v961
    %1090 = vst [vmem:[#allocation2 + $0x260] sm:$0xff] %v962
    %1091 = vst [vmem:[#allocation2 + $0x268] sm:$0xff] %v963
    %1092 = vst [vmem:[#allocation2 + $0x270] sm:$0xff] %v964
    %1093 = vst [vmem:[#allocation2 + $0x278] sm:$0xff] %v965
    %1094 = vst [vmem:[#allocation2 + $0x280] sm:$0xff] %v966
    %1095 = vst [vmem:[#allocation2 + $0x288] sm:$0xff] %v967
    %1096 = vst [vmem:[#allocation2 + $0x290] sm:$0xff] %v968
    %1097 = vst [vmem:[#allocation2 + $0x298] sm:$0xff] %v969
    %1098 = vst [vmem:[#allocation2 + $0x2a0] sm:$0xff] %v970
    %1099 = vst [vmem:[#allocation2 + $0x2a8] sm:$0xff] %v971
    %1100 = vst [vmem:[#allocation2 + $0x2b0] sm:$0xff] %v972
    %1101 = vst [vmem:[#allocation2 + $0x2b8] sm:$0xff] %v973
    %1102 = vst [vmem:[#allocation2 + $0x2c0] sm:$0xff] %v974
    %1103 = vst [vmem:[#allocation2 + $0x2c8] sm:$0xff] %v975
    %1104 = vst [vmem:[#allocation2 + $0x2d0] sm:$0xff] %v976
    %1105 = vst [vmem:[#allocation2 + $0x2d8] sm:$0xff] %v977
    %1106 = vst [vmem:[#allocation2 + $0x2e0] sm:$0xff] %v978
    %1107 = vst [vmem:[#allocation2 + $0x2e8] sm:$0xff] %v979
    %1108 = vst [vmem:[#allocation2 + $0x2f0] sm:$0xff] %v980
    %1109 = vst [vmem:[#allocation2 + $0x2f8] sm:$0xff] %v981
    %1110 = vst [vmem:[#allocation2 + $0x300] sm:$0xff] %v982
    %1111 = vst [vmem:[#allocation2 + $0x308] sm:$0xff] %v983
    %1112 = vst [vmem:[#allocation2 + $0x310] sm:$0xff] %v984
    %1113 = vst [vmem:[#allocation2 + $0x318] sm:$0xff] %v985
    %1114 = vst [vmem:[#allocation2 + $0x320] sm:$0xff] %v986
    %1115 = vst [vmem:[#allocation2 + $0x328] sm:$0xff] %v987
    %1116 = vst [vmem:[#allocation2 + $0x330] sm:$0xff] %v988
    %1117 = vst [vmem:[#allocation2 + $0x338] sm:$0xff] %v989
    %1118 = vst [vmem:[#allocation2 + $0x340] sm:$0xff] %v990
    %1119 = vst [vmem:[#allocation2 + $0x348] sm:$0xff] %v991
    %1120 = vst [vmem:[#allocation2 + $0x350] sm:$0xff] %v992
    %1121 = vst [vmem:[#allocation2 + $0x358] sm:$0xff] %v993
    %1122 = vst [vmem:[#allocation2 + $0x360] sm:$0xff] %v994
    %1123 = vst [vmem:[#allocation2 + $0x368] sm:$0xff] %v995
    %1124 = vst [vmem:[#allocation2 + $0x370] sm:$0xff] %v996
    %1125 = vst [vmem:[#allocation2 + $0x378] sm:$0xff] %v997
    %1126 = vst [vmem:[#allocation2 + $0x380] sm:$0xff] %v998
    %1127 = vst [vmem:[#allocation2 + $0x388] sm:$0xff] %v999
    %1128 = vst [vmem:[#allocation2 + $0x390] sm:$0xff] %v1000
    %1129 = vst [vmem:[#allocation2 + $0x398] sm:$0xff] %v1001
    %1130 = vst [vmem:[#allocation2 + $0x3a0] sm:$0xff] %v1002
    %1131 = vst [vmem:[#allocation2 + $0x3a8] sm:$0xff] %v1003
    %1132 = vst [vmem:[#allocation2 + $0x3b0] sm:$0xff] %v1004
    %1133 = vst [vmem:[#allocation2 + $0x3b8] sm:$0xff] %v1005
    %1134 = vst [vmem:[#allocation2 + $0x3c0] sm:$0xff] %v1006
    %1135 = vst [vmem:[#allocation2 + $0x3c8] sm:$0xff] %v1007
    %1136 = vst [vmem:[#allocation2 + $0x3d0] sm:$0xff] %v1008
    %1137 = vst [vmem:[#allocation2 + $0x3d8] sm:$0xff] %v1009
    %1138 = vst [vmem:[#allocation2 + $0x3e0] sm:$0xff] %v1010
    %1139 = vst [vmem:[#allocation2 + $0x3e8] sm:$0xff] %v1011
    %1140 = vst [vmem:[#allocation2 + $0x3f0] sm:$0xff] %v1012
    %1141 = vst [vmem:[#allocation2 + $0x3f8] sm:$0xff] %v1013
    // Predicated region
    $region14: #{tpu_custom_call.1} parent=1 // pred_check
      %p1142 = pneg %p13
    $region15: #{tpu_custom_call.1} parent=1 // pred_check_branch
      %1144 = sbr.rel (%p1142) target = $region17
    $region16: #{tpu_custom_call.1} parent=1 // pred_region
      %v1145 = vld [vmem:[#allocation2] sm:$0xff]
      %v1146 = vld [vmem:[#allocation2 + $0x8] sm:$0xff]
      %v1147 = vld [vmem:[#allocation2 + $0x10] sm:$0xff]
      %v1148 = vld [vmem:[#allocation2 + $0x18] sm:$0xff]
      %v1149 = vld [vmem:[#allocation2 + $0x20] sm:$0xff]
      %v1150 = vld [vmem:[#allocation2 + $0x28] sm:$0xff]
      %v1151 = vld [vmem:[#allocation2 + $0x30] sm:$0xff]
      %v1152 = vld [vmem:[#allocation2 + $0x38] sm:$0xff]
      %v1153 = vld [vmem:[#allocation2 + $0x40] sm:$0xff]
      %v1154 = vld [vmem:[#allocation2 + $0x48] sm:$0xff]
      %v1155 = vld [vmem:[#allocation2 + $0x50] sm:$0xff]
      %v1156 = vld [vmem:[#allocation2 + $0x58] sm:$0xff]
      %v1157 = vld [vmem:[#allocation2 + $0x60] sm:$0xff]
      %v1158 = vld [vmem:[#allocation2 + $0x68] sm:$0xff]
      %v1159 = vld [vmem:[#allocation2 + $0x70] sm:$0xff]
      %v1160 = vld [vmem:[#allocation2 + $0x78] sm:$0xff]
      %v1161 = vld [vmem:[#allocation2 + $0x80] sm:$0xff]
      %v1162 = vld [vmem:[#allocation2 + $0x88] sm:$0xff]
      %v1163 = vld [vmem:[#allocation2 + $0x90] sm:$0xff]
      %v1164 = vld [vmem:[#allocation2 + $0x98] sm:$0xff]
      %v1165 = vld [vmem:[#allocation2 + $0xa0] sm:$0xff]
      %v1166 = vld [vmem:[#allocation2 + $0xa8] sm:$0xff]
      %v1167 = vld [vmem:[#allocation2 + $0xb0] sm:$0xff]
      %v1168 = vld [vmem:[#allocation2 + $0xb8] sm:$0xff]
      %v1169 = vld [vmem:[#allocation2 + $0xc0] sm:$0xff]
      %v1170 = vld [vmem:[#allocation2 + $0xc8] sm:$0xff]
      %v1171 = vld [vmem:[#allocation2 + $0xd0] sm:$0xff]
      %v1172 = vld [vmem:[#allocation2 + $0xd8] sm:$0xff]
      %v1173 = vld [vmem:[#allocation2 + $0xe0] sm:$0xff]
      %v1174 = vld [vmem:[#allocation2 + $0xe8] sm:$0xff]
      %v1175 = vld [vmem:[#allocation2 + $0xf0] sm:$0xff]
      %v1176 = vld [vmem:[#allocation2 + $0xf8] sm:$0xff]
      %v1177 = vld [vmem:[#allocation2 + $0x100] sm:$0xff]
      %v1178 = vld [vmem:[#allocation2 + $0x108] sm:$0xff]
      %v1179 = vld [vmem:[#allocation2 + $0x110] sm:$0xff]
      %v1180 = vld [vmem:[#allocation2 + $0x118] sm:$0xff]
      %v1181 = vld [vmem:[#allocation2 + $0x120] sm:$0xff]
      %v1182 = vld [vmem:[#allocation2 + $0x128] sm:$0xff]
      %v1183 = vld [vmem:[#allocation2 + $0x130] sm:$0xff]
      %v1184 = vld [vmem:[#allocation2 + $0x138] sm:$0xff]
      %v1185 = vld [vmem:[#allocation2 + $0x140] sm:$0xff]
      %v1186 = vld [vmem:[#allocation2 + $0x148] sm:$0xff]
      %v1187 = vld [vmem:[#allocation2 + $0x150] sm:$0xff]
      %v1188 = vld [vmem:[#allocation2 + $0x158] sm:$0xff]
      %v1189 = vld [vmem:[#allocation2 + $0x160] sm:$0xff]
      %v1190 = vld [vmem:[#allocation2 + $0x168] sm:$0xff]
      %v1191 = vld [vmem:[#allocation2 + $0x170] sm:$0xff]
      %v1192 = vld [vmem:[#allocation2 + $0x178] sm:$0xff]
      %v1193 = vld [vmem:[#allocation2 + $0x180] sm:$0xff]
      %v1194 = vld [vmem:[#allocation2 + $0x188] sm:$0xff]
      %v1195 = vld [vmem:[#allocation2 + $0x190] sm:$0xff]
      %v1196 = vld [vmem:[#allocation2 + $0x198] sm:$0xff]
      %v1197 = vld [vmem:[#allocation2 + $0x1a0] sm:$0xff]
      %v1198 = vld [vmem:[#allocation2 + $0x1a8] sm:$0xff]
      %v1199 = vld [vmem:[#allocation2 + $0x1b0] sm:$0xff]
      %v1200 = vld [vmem:[#allocation2 + $0x1b8] sm:$0xff]
      %v1201 = vld [vmem:[#allocation2 + $0x1c0] sm:$0xff]
      %v1202 = vld [vmem:[#allocation2 + $0x1c8] sm:$0xff]
      %v1203 = vld [vmem:[#allocation2 + $0x1d0] sm:$0xff]
      %v1204 = vld [vmem:[#allocation2 + $0x1d8] sm:$0xff]
      %v1205 = vld [vmem:[#allocation2 + $0x1e0] sm:$0xff]
      %v1206 = vld [vmem:[#allocation2 + $0x1e8] sm:$0xff]
      %v1207 = vld [vmem:[#allocation2 + $0x1f0] sm:$0xff]
      %v1208 = vld [vmem:[#allocation2 + $0x1f8] sm:$0xff]
      %v1209 = vld [vmem:[#allocation2 + $0x200] sm:$0xff]
      %v1210 = vld [vmem:[#allocation2 + $0x208] sm:$0xff]
      %v1211 = vld [vmem:[#allocation2 + $0x210] sm:$0xff]
      %v1212 = vld [vmem:[#allocation2 + $0x218] sm:$0xff]
      %v1213 = vld [vmem:[#allocation2 + $0x220] sm:$0xff]
      %v1214 = vld [vmem:[#allocation2 + $0x228] sm:$0xff]
      %v1215 = vld [vmem:[#allocation2 + $0x230] sm:$0xff]
      %v1216 = vld [vmem:[#allocation2 + $0x238] sm:$0xff]
      %v1217 = vld [vmem:[#allocation2 + $0x240] sm:$0xff]
      %v1218 = vld [vmem:[#allocation2 + $0x248] sm:$0xff]
      %v1219 = vld [vmem:[#allocation2 + $0x250] sm:$0xff]
      %v1220 = vld [vmem:[#allocation2 + $0x258] sm:$0xff]
      %v1221 = vld [vmem:[#allocation2 + $0x260] sm:$0xff]
      %v1222 = vld [vmem:[#allocation2 + $0x268] sm:$0xff]
      %v1223 = vld [vmem:[#allocation2 + $0x270] sm:$0xff]
      %v1224 = vld [vmem:[#allocation2 + $0x278] sm:$0xff]
      %v1225 = vld [vmem:[#allocation2 + $0x280] sm:$0xff]
      %v1226 = vld [vmem:[#allocation2 + $0x288] sm:$0xff]
      %v1227 = vld [vmem:[#allocation2 + $0x290] sm:$0xff]
      %v1228 = vld [vmem:[#allocation2 + $0x298] sm:$0xff]
      %v1229 = vld [vmem:[#allocation2 + $0x2a0] sm:$0xff]
      %v1230 = vld [vmem:[#allocation2 + $0x2a8] sm:$0xff]
      %v1231 = vld [vmem:[#allocation2 + $0x2b0] sm:$0xff]
      %v1232 = vld [vmem:[#allocation2 + $0x2b8] sm:$0xff]
      %v1233 = vld [vmem:[#allocation2 + $0x2c0] sm:$0xff]
      %v1234 = vld [vmem:[#allocation2 + $0x2c8] sm:$0xff]
      %v1235 = vld [vmem:[#allocation2 + $0x2d0] sm:$0xff]
      %v1236 = vld [vmem:[#allocation2 + $0x2d8] sm:$0xff]
      %v1237 = vld [vmem:[#allocation2 + $0x2e0] sm:$0xff]
      %v1238 = vld [vmem:[#allocation2 + $0x2e8] sm:$0xff]
      %v1239 = vld [vmem:[#allocation2 + $0x2f0] sm:$0xff]
      %v1240 = vld [vmem:[#allocation2 + $0x2f8] sm:$0xff]
      %v1241 = vld [vmem:[#allocation2 + $0x300] sm:$0xff]
      %v1242 = vld [vmem:[#allocation2 + $0x308] sm:$0xff]
      %v1243 = vld [vmem:[#allocation2 + $0x310] sm:$0xff]
      %v1244 = vld [vmem:[#allocation2 + $0x318] sm:$0xff]
      %v1245 = vld [vmem:[#allocation2 + $0x320] sm:$0xff]
      %v1246 = vld [vmem:[#allocation2 + $0x328] sm:$0xff]
      %v1247 = vld [vmem:[#allocation2 + $0x330] sm:$0xff]
      %v1248 = vld [vmem:[#allocation2 + $0x338] sm:$0xff]
      %v1249 = vld [vmem:[#allocation2 + $0x340] sm:$0xff]
      %v1250 = vld [vmem:[#allocation2 + $0x348] sm:$0xff]
      %v1251 = vld [vmem:[#allocation2 + $0x350] sm:$0xff]
      %v1252 = vld [vmem:[#allocation2 + $0x358] sm:$0xff]
      %v1253 = vld [vmem:[#allocation2 + $0x360] sm:$0xff]
      %v1254 = vld [vmem:[#allocation2 + $0x368] sm:$0xff]
      %v1255 = vld [vmem:[#allocation2 + $0x370] sm:$0xff]
      %v1256 = vld [vmem:[#allocation2 + $0x378] sm:$0xff]
      %v1257 = vld [vmem:[#allocation2 + $0x380] sm:$0xff]
      %v1258 = vld [vmem:[#allocation2 + $0x388] sm:$0xff]
      %v1259 = vld [vmem:[#allocation2 + $0x390] sm:$0xff]
      %v1260 = vld [vmem:[#allocation2 + $0x398] sm:$0xff]
      %v1261 = vld [vmem:[#allocation2 + $0x3a0] sm:$0xff]
      %v1262 = vld [vmem:[#allocation2 + $0x3a8] sm:$0xff]
      %v1263 = vld [vmem:[#allocation2 + $0x3b0] sm:$0xff]
      %v1264 = vld [vmem:[#allocation2 + $0x3b8] sm:$0xff]
      %v1265 = vld [vmem:[#allocation2 + $0x3c0] sm:$0xff]
      %v1266 = vld [vmem:[#allocation2 + $0x3c8] sm:$0xff]
      %v1267 = vld [vmem:[#allocation2 + $0x3d0] sm:$0xff]
      %v1268 = vld [vmem:[#allocation2 + $0x3d8] sm:$0xff]
      %v1269 = vld [vmem:[#allocation2 + $0x3e0] sm:$0xff]
      %v1270 = vld [vmem:[#allocation2 + $0x3e8] sm:$0xff]
      %v1271 = vld [vmem:[#allocation2 + $0x3f0] sm:$0xff]
      %v1272 = vld [vmem:[#allocation2 + $0x3f8] sm:$0xff]
      %v1273 = vpack.c.bf16 %v1146, %v1145
      %v1274 = vpack.c.bf16 %v1148, %v1147
      %v1275 = vpack.c.bf16 %v1150, %v1149
      %v1276 = vpack.c.bf16 %v1152, %v1151
      %v1277 = vpack.c.bf16 %v1154, %v1153
      %v1278 = vpack.c.bf16 %v1156, %v1155
      %v1279 = vpack.c.bf16 %v1158, %v1157
      %v1280 = vpack.c.bf16 %v1160, %v1159
      %v1281 = vpack.c.bf16 %v1162, %v1161
      %v1282 = vpack.c.bf16 %v1164, %v1163
      %v1283 = vpack.c.bf16 %v1166, %v1165
      %v1284 = vpack.c.bf16 %v1168, %v1167
      %v1285 = vpack.c.bf16 %v1170, %v1169
      %v1286 = vpack.c.bf16 %v1172, %v1171
      %v1287 = vpack.c.bf16 %v1174, %v1173
      %v1288 = vpack.c.bf16 %v1176, %v1175
      %v1289 = vpack.c.bf16 %v1178, %v1177
      %v1290 = vpack.c.bf16 %v1180, %v1179
      %v1291 = vpack.c.bf16 %v1182, %v1181
      %v1292 = vpack.c.bf16 %v1184, %v1183
      %v1293 = vpack.c.bf16 %v1186, %v1185
      %v1294 = vpack.c.bf16 %v1188, %v1187
      %v1295 = vpack.c.bf16 %v1190, %v1189
      %v1296 = vpack.c.bf16 %v1192, %v1191
      %v1297 = vpack.c.bf16 %v1194, %v1193
      %v1298 = vpack.c.bf16 %v1196, %v1195
      %v1299 = vpack.c.bf16 %v1198, %v1197
      %v1300 = vpack.c.bf16 %v1200, %v1199
      %v1301 = vpack.c.bf16 %v1202, %v1201
      %v1302 = vpack.c.bf16 %v1204, %v1203
      %v1303 = vpack.c.bf16 %v1206, %v1205
      %v1304 = vpack.c.bf16 %v1208, %v1207
      %v1305 = vpack.c.bf16 %v1210, %v1209
      %v1306 = vpack.c.bf16 %v1212, %v1211
      %v1307 = vpack.c.bf16 %v1214, %v1213
      %v1308 = vpack.c.bf16 %v1216, %v1215
      %v1309 = vpack.c.bf16 %v1218, %v1217
      %v1310 = vpack.c.bf16 %v1220, %v1219
      %v1311 = vpack.c.bf16 %v1222, %v1221
      %v1312 = vpack.c.bf16 %v1224, %v1223
      %v1313 = vpack.c.bf16 %v1226, %v1225
      %v1314 = vpack.c.bf16 %v1228, %v1227
      %v1315 = vpack.c.bf16 %v1230, %v1229
      %v1316 = vpack.c.bf16 %v1232, %v1231
      %v1317 = vpack.c.bf16 %v1234, %v1233
      %v1318 = vpack.c.bf16 %v1236, %v1235
      %v1319 = vpack.c.bf16 %v1238, %v1237
      %v1320 = vpack.c.bf16 %v1240, %v1239
      %v1321 = vpack.c.bf16 %v1242, %v1241
      %v1322 = vpack.c.bf16 %v1244, %v1243
      %v1323 = vpack.c.bf16 %v1246, %v1245
      %v1324 = vpack.c.bf16 %v1248, %v1247
      %v1325 = vpack.c.bf16 %v1250, %v1249
      %v1326 = vpack.c.bf16 %v1252, %v1251
      %v1327 = vpack.c.bf16 %v1254, %v1253
      %v1328 = vpack.c.bf16 %v1256, %v1255
      %v1329 = vpack.c.bf16 %v1258, %v1257
      %v1330 = vpack.c.bf16 %v1260, %v1259
      %v1331 = vpack.c.bf16 %v1262, %v1261
      %v1332 = vpack.c.bf16 %v1264, %v1263
      %v1333 = vpack.c.bf16 %v1266, %v1265
      %v1334 = vpack.c.bf16 %v1268, %v1267
      %v1335 = vpack.c.bf16 %v1270, %v1269
      %v1336 = vpack.c.bf16 %v1272, %v1271
      %1337 = vst [vmem:[#allocation3] sm:$0xff] %v1273
      %1338 = vst [vmem:[#allocation3 + $0x8] sm:$0xff] %v1274
      %1339 = vst [vmem:[#allocation3 + $0x10] sm:$0xff] %v1275
      %1340 = vst [vmem:[#allocation3 + $0x18] sm:$0xff] %v1276
      %1341 = vst [vmem:[#allocation3 + $0x20] sm:$0xff] %v1277
      %1342 = vst [vmem:[#allocation3 + $0x28] sm:$0xff] %v1278
      %1343 = vst [vmem:[#allocation3 + $0x30] sm:$0xff] %v1279
      %1344 = vst [vmem:[#allocation3 + $0x38] sm:$0xff] %v1280
      %1345 = vst [vmem:[#allocation3 + $0x40] sm:$0xff] %v1281
      %1346 = vst [vmem:[#allocation3 + $0x48] sm:$0xff] %v1282
      %1347 = vst [vmem:[#allocation3 + $0x50] sm:$0xff] %v1283
      %1348 = vst [vmem:[#allocation3 + $0x58] sm:$0xff] %v1284
      %1349 = vst [vmem:[#allocation3 + $0x60] sm:$0xff] %v1285
      %1350 = vst [vmem:[#allocation3 + $0x68] sm:$0xff] %v1286
      %1351 = vst [vmem:[#allocation3 + $0x70] sm:$0xff] %v1287
      %1352 = vst [vmem:[#allocation3 + $0x78] sm:$0xff] %v1288
      %1353 = vst [vmem:[#allocation3 + $0x80] sm:$0xff] %v1289
      %1354 = vst [vmem:[#allocation3 + $0x88] sm:$0xff] %v1290
      %1355 = vst [vmem:[#allocation3 + $0x90] sm:$0xff] %v1291
      %1356 = vst [vmem:[#allocation3 + $0x98] sm:$0xff] %v1292
      %1357 = vst [vmem:[#allocation3 + $0xa0] sm:$0xff] %v1293
      %1358 = vst [vmem:[#allocation3 + $0xa8] sm:$0xff] %v1294
      %1359 = vst [vmem:[#allocation3 + $0xb0] sm:$0xff] %v1295
      %1360 = vst [vmem:[#allocation3 + $0xb8] sm:$0xff] %v1296
      %1361 = vst [vmem:[#allocation3 + $0xc0] sm:$0xff] %v1297
      %1362 = vst [vmem:[#allocation3 + $0xc8] sm:$0xff] %v1298
      %1363 = vst [vmem:[#allocation3 + $0xd0] sm:$0xff] %v1299
      %1364 = vst [vmem:[#allocation3 + $0xd8] sm:$0xff] %v1300
      %1365 = vst [vmem:[#allocation3 + $0xe0] sm:$0xff] %v1301
      %1366 = vst [vmem:[#allocation3 + $0xe8] sm:$0xff] %v1302
      %1367 = vst [vmem:[#allocation3 + $0xf0] sm:$0xff] %v1303
      %1368 = vst [vmem:[#allocation3 + $0xf8] sm:$0xff] %v1304
      %1369 = vst [vmem:[#allocation3 + $0x100] sm:$0xff] %v1305
      %1370 = vst [vmem:[#allocation3 + $0x108] sm:$0xff] %v1306
      %1371 = vst [vmem:[#allocation3 + $0x110] sm:$0xff] %v1307
      %1372 = vst [vmem:[#allocation3 + $0x118] sm:$0xff] %v1308
      %1373 = vst [vmem:[#allocation3 + $0x120] sm:$0xff] %v1309
      %1374 = vst [vmem:[#allocation3 + $0x128] sm:$0xff] %v1310
      %1375 = vst [vmem:[#allocation3 + $0x130] sm:$0xff] %v1311
      %1376 = vst [vmem:[#allocation3 + $0x138] sm:$0xff] %v1312
      %1377 = vst [vmem:[#allocation3 + $0x140] sm:$0xff] %v1313
      %1378 = vst [vmem:[#allocation3 + $0x148] sm:$0xff] %v1314
      %1379 = vst [vmem:[#allocation3 + $0x150] sm:$0xff] %v1315
      %1380 = vst [vmem:[#allocation3 + $0x158] sm:$0xff] %v1316
      %1381 = vst [vmem:[#allocation3 + $0x160] sm:$0xff] %v1317
      %1382 = vst [vmem:[#allocation3 + $0x168] sm:$0xff] %v1318
      %1383 = vst [vmem:[#allocation3 + $0x170] sm:$0xff] %v1319
      %1384 = vst [vmem:[#allocation3 + $0x178] sm:$0xff] %v1320
      %1385 = vst [vmem:[#allocation3 + $0x180] sm:$0xff] %v1321
      %1386 = vst [vmem:[#allocation3 + $0x188] sm:$0xff] %v1322
      %1387 = vst [vmem:[#allocation3 + $0x190] sm:$0xff] %v1323
      %1388 = vst [vmem:[#allocation3 + $0x198] sm:$0xff] %v1324
      %1389 = vst [vmem:[#allocation3 + $0x1a0] sm:$0xff] %v1325
      %1390 = vst [vmem:[#allocation3 + $0x1a8] sm:$0xff] %v1326
      %1391 = vst [vmem:[#allocation3 + $0x1b0] sm:$0xff] %v1327
      %1392 = vst [vmem:[#allocation3 + $0x1b8] sm:$0xff] %v1328
      %1393 = vst [vmem:[#allocation3 + $0x1c0] sm:$0xff] %v1329
      %1394 = vst [vmem:[#allocation3 + $0x1c8] sm:$0xff] %v1330
      %1395 = vst [vmem:[#allocation3 + $0x1d0] sm:$0xff] %v1331
      %1396 = vst [vmem:[#allocation3 + $0x1d8] sm:$0xff] %v1332
      %1397 = vst [vmem:[#allocation3 + $0x1e0] sm:$0xff] %v1333
      %1398 = vst [vmem:[#allocation3 + $0x1e8] sm:$0xff] %v1334
      %1399 = vst [vmem:[#allocation3 + $0x1f0] sm:$0xff] %v1335
      %1400 = vst [vmem:[#allocation3 + $0x1f8] sm:$0xff] %v1336
    $region17: #{tpu_custom_call.1} parent=1 // pred_fallthru
      _
    // Predicated region
    $region18: #{tpu_custom_call.1} parent=1 // pred_check
      _
    $region19: #{tpu_custom_call.1} parent=1 // pred_check_branch
      %1402 = sbr.rel (0) target = $region21
    $region20: #{tpu_custom_call.1} parent=1 // pred_region
      %1404 = vsyncadd [#allocation4], 0
      %s1405 = sshll.u32 [#allocation3], 4
      %s1406 = int_to_ptr.vmem [resolvable:$true] %s1405
      %s1407 = sshll.u32 %s2, 4
      %s1408 = int_to_ptr.hbm [resolvable:$true] %s1407
      %1413 = dma.vmem_to_hbm [thread:$0]  %s1406, 8192, %s1408, [#allocation4], 256, 256, 16
    $region21: #{tpu_custom_call.1} parent=1 // pred_fallthru
      _
    // Predicated region
    $region22: #{tpu_custom_call.1} parent=1 // pred_check
      _
    $region23: #{tpu_custom_call.1} parent=1 // pred_check_branch
      %1415 = sbr.rel (0) target = $region25
    $region24: #{tpu_custom_call.1} parent=1 // pred_region
      %1417 = dma.done [#allocation4], 8192
    $region25: #{tpu_custom_call.1} parent=1 // pred_fallthru
      _
    %1418 = vsyncpa [#allocation4], 1

</llo_original>
